<compile_context>
chip_gen: v5e
topology: v5e:2x2
jax: 0.10.0
libtpu: 0.0.40
codegen_flags: <defaults>
</compile_context>

<pallas_src>
import math

import jax
import jax.numpy as jnp
from jax.experimental import pallas as pl
from jax.experimental.pallas import tpu as pltpu


# ----------------------------------------------------------------------------
# Fused kernel: LSTM -> attention pooling -> linear head -> softmax
# Inputs (all full arrays resident in VMEM):
#   x_ref   : [B, T, E]   input documents (batch_first, matching PyTorch)
#   wih_ref : [E, 4H]     LSTM W_ih^T  (PyTorch gate order i, f, g, o)
#   whh_ref : [H, 4H]     LSTM W_hh^T
#   bg_ref  : [1, 4H]     b_ih + b_hh
#   w_ref   : [H, H]      attention projection w
#   ba_ref  : [1, H]      attention bias b
#   c_ref   : [1, H]      attention vector c ([H,1] transposed)
#   lw_ref  : [H, O]      linear weight^T
#   lb_ref  : [1, O]      linear bias
# Output:
#   o_ref   : [B, O]      softmax class probabilities
# Scratch:
#   a_sc    : [T, B, H]   time-major LSTM hidden states (stays in VMEM)
# ----------------------------------------------------------------------------
def attn_net_kernel(x_ref, wih_ref, whh_ref, bg_ref,
                    w_ref, ba_ref, c_ref, lw_ref, lb_ref,
                    o_ref, a_sc):
    B, T, E = x_ref.shape
    H = whh_ref.shape[0]

    # ---- LSTM ---------------------------------------------------------------
    # Input projection for all time steps at once (hoisted off the serial
    # recurrence): [B*T, E] @ [E, 4H] + bias, then view as [B, T, 4H].
    xg = (jnp.dot(x_ref[...].reshape(B * T, E), wih_ref[...],
                  preferred_element_type=jnp.float32)
          + bg_ref[...]).reshape(B, T, 4 * H)

    whh = whh_ref[...]                        # hoisted weight load
    h = jnp.zeros((B, H), jnp.float32)
    c = jnp.zeros((B, H), jnp.float32)

    for t in range(T):                        # static unroll (T is fixed)
        gates = xg[:, t, :] + jnp.dot(h, whh,
                                      preferred_element_type=jnp.float32)
        i_g = jax.nn.sigmoid(gates[:, 0 * H:1 * H])
        f_g = jax.nn.sigmoid(gates[:, 1 * H:2 * H])
        g_g = jnp.tanh(gates[:, 2 * H:3 * H])
        o_g = jax.nn.sigmoid(gates[:, 3 * H:4 * H])
        c = f_g * c + i_g * g_g
        h = o_g * jnp.tanh(c)
        a_sc[t] = h                           # a[t] = h_t  (time-major)

    a = a_sc[...]                             # [T, B, H]

    # ---- attention pooling --------------------------------------------------
    # u = tanh(a @ w + b) as one flat 2-D MXU matmul over all (t, b) rows.
    u = jnp.tanh(
        jnp.dot(a.reshape(T * B, H), w_ref[...],
                preferred_element_type=jnp.float32)
        + ba_ref[...]
    ).reshape(T, B, H)

    # scores = u @ c  -> [T, B, 1]  (multiply + lane reduce, not an N=1 matmul)
    scores = jnp.sum(u * c_ref[...], axis=-1, keepdims=True)

    # softmax over the sequence axis (PyTorch F.softmax(..., dim=1))
    m = jnp.max(scores, axis=0, keepdims=True)
    e = jnp.exp(scores - m)
    s = e * pl.reciprocal(jnp.sum(e, axis=0, keepdims=True), approx=True)

    # z[b, h] = sum_t a[t, b, h] * s[t, b]
    z = jnp.sum(a * s, axis=0)                # [B, H]

    # dropout == identity (eval / p = 0)

    # ---- linear head + class softmax ---------------------------------------
    logits = jnp.dot(z, lw_ref[...],
                     preferred_element_type=jnp.float32) + lb_ref[...]
    lm = jnp.max(logits, axis=-1, keepdims=True)
    le = jnp.exp(logits - lm)
    o_ref[...] = le * pl.reciprocal(jnp.sum(le, axis=-1, keepdims=True),
                                    approx=False)


# ----------------------------------------------------------------------------
# Python wrapper
# ----------------------------------------------------------------------------
def attn_net_forward(doc, params):
    """doc: [B, T, E] float32 -> out: [B, O] float32."""
    B, T, E = doc.shape
    H = params["w_hh"].shape[0]   # w_hh stored transposed as [H, 4H]
    O = params["lw"].shape[1]     # lw stored transposed as [H, O]

    vmem = pl.BlockSpec(memory_space=pltpu.MemorySpace.VMEM)

    return pl.pallas_call(
        attn_net_kernel,
        out_shape=jax.ShapeDtypeStruct((B, O), jnp.float32),
        in_specs=[vmem] * 9,
        out_specs=vmem,
        scratch_shapes=[pltpu.VMEM((T, B, H), jnp.float32)],
    )(doc, params["w_ih"], params["w_hh"], params["b_lstm"],
      params["w_attn"], params["b_attn"], params["c_attn"],
      params["lw"], params["lb"])


def init_params(key, embed_dim, hidden_dim, output_dim):
    """Deterministic synthetic parameters mirroring the PyTorch init scheme."""
    D = hidden_dim  # num_directions(=1) * hidden_dim
    ks = jax.random.split(key, 9)

    def unif(k, shape, bound):
        return jax.random.uniform(k, shape, jnp.float32, -bound, bound)

    # nn.LSTM default init: U(-1/sqrt(H), 1/sqrt(H)); gate order i, f, g, o.
    stdv = 1.0 / math.sqrt(hidden_dim)
    w_ih = unif(ks[0], (4 * hidden_dim, embed_dim), stdv)   # [4H, E]
    w_hh = unif(ks[1], (4 * hidden_dim, hidden_dim), stdv)  # [4H, H]
    b_ih = unif(ks[2], (4 * hidden_dim,), stdv)
    b_hh = unif(ks[3], (4 * hidden_dim,), stdv)

    # kaiming_uniform_(fan_in, relu): bound = sqrt(2) * sqrt(3 / fan_in)
    bound_w = math.sqrt(2.0) * math.sqrt(3.0 / D)    # w: [D, D], fan_in = D
    w_attn = unif(ks[4], (D, D), bound_w)
    b_attn = jnp.zeros((1, D), jnp.float32)
    bound_c = math.sqrt(2.0) * math.sqrt(3.0 / 1.0)  # c: [D, 1], fan_in = 1
    c_attn = unif(ks[5], (D, 1), bound_c)

    # nn.Linear default init: U(-1/sqrt(fan_in), 1/sqrt(fan_in))
    bound_l = 1.0 / math.sqrt(D)
    lw = unif(ks[6], (output_dim, D), bound_l)
    lb = unif(ks[7], (output_dim,), bound_l)

    return {
        "w_ih": jnp.transpose(w_ih),                      # [E, 4H]
        "w_hh": jnp.transpose(w_hh),                      # [H, 4H]
        "b_lstm": (b_ih + b_hh).reshape(1, 4 * hidden_dim),
        "w_attn": w_attn,                                 # [D, D]
        "b_attn": b_attn,                                 # [1, D]
        "c_attn": jnp.transpose(c_attn),                  # [1, D]
        "lw": jnp.transpose(lw),                          # [D, O]
        "lb": lb.reshape(1, output_dim),                  # [1, O]
    }


if __name__ == "__main__":
    B, T = 2, 8
    EMBED_DIM, HIDDEN_DIM, OUTPUT_DIM = 32, 32, 4

    key = jax.random.PRNGKey(0)
    k_param, k_doc = jax.random.split(key)

    params = init_params(k_param, EMBED_DIM, HIDDEN_DIM, OUTPUT_DIM)
    doc = jax.random.normal(k_doc, (B, T, EMBED_DIM), jnp.float32)

    out = attn_net_forward(doc, params)
    out = jax.block_until_ready(out)

    assert out.shape == (B, OUTPUT_DIM)
    assert bool(jnp.all(jnp.isfinite(out)))
    # rows of the final softmax should sum to 1
    assert bool(jnp.allclose(jnp.sum(out, axis=1), 1.0, atol=1e-4))

    print("KERNEL_OK")
</pallas_src>

<mosaic_0001>
module attributes {stable_mosaic.version = 11 : i64} {
  func.func @attn_net_kernel(%arg0: memref<2x8x32xf32, #tpu.memory_space<vmem>>, %arg1: memref<32x128xf32, #tpu.memory_space<vmem>>, %arg2: memref<32x128xf32, #tpu.memory_space<vmem>>, %arg3: memref<1x128xf32, #tpu.memory_space<vmem>>, %arg4: memref<32x32xf32, #tpu.memory_space<vmem>>, %arg5: memref<1x32xf32, #tpu.memory_space<vmem>>, %arg6: memref<1x32xf32, #tpu.memory_space<vmem>>, %arg7: memref<32x4xf32, #tpu.memory_space<vmem>>, %arg8: memref<1x4xf32, #tpu.memory_space<vmem>>, %arg9: memref<2x4xf32, #tpu.memory_space<vmem>>, %arg10: memref<8x2x32xf32, #tpu.memory_space<vmem>>) attributes {dimension_semantics = [], scalar_prefetch = 0 : i64, scratch_operands = 1 : i64, tpu.core_type = #tpu.core_type<tc>} {
    %c0 = arith.constant 0 : index
    %c0_0 = arith.constant 0 : index
    %c0_1 = arith.constant 0 : index
    %0 = vector.load %arg0[%c0, %c0_0, %c0_1] : memref<2x8x32xf32, #tpu.memory_space<vmem>>, vector<2x8x32xf32>
    %1 = vector.shape_cast %0 : vector<2x8x32xf32> to vector<16x32xf32>
    %c0_2 = arith.constant 0 : index
    %c0_3 = arith.constant 0 : index
    %2 = vector.load %arg1[%c0_2, %c0_3] : memref<32x128xf32, #tpu.memory_space<vmem>>, vector<32x128xf32>
    %cst = arith.constant dense<0.000000e+00> : vector<16x128xf32>
    %3 = tpu.matmul %1, %2, %cst {dimension_numbers = #tpu.dot_dimension_numbers<[1], [0], [0], [1], [0, 0, 1, 1], [], []>} : vector<16x32xf32>, vector<32x128xf32>, vector<16x128xf32> -> vector<16x128xf32>
    %c0_4 = arith.constant 0 : index
    %c0_5 = arith.constant 0 : index
    %4 = vector.load %arg3[%c0_4, %c0_5] : memref<1x128xf32, #tpu.memory_space<vmem>>, vector<1x128xf32>
    %5 = vector.broadcast %4 : vector<1x128xf32> to vector<16x128xf32>
    %6 = arith.addf %3, %5 : vector<16x128xf32>
    %7 = vector.shape_cast %6 : vector<16x128xf32> to vector<2x8x128xf32>
    %c0_6 = arith.constant 0 : index
    %c0_7 = arith.constant 0 : index
    %8 = vector.load %arg2[%c0_6, %c0_7] : memref<32x128xf32, #tpu.memory_space<vmem>>, vector<32x128xf32>
    %cst_8 = arith.constant 0.000000e+00 : f32
    %9 = vector.broadcast %cst_8 : f32 to vector<2x32xf32>
    %cst_9 = arith.constant 0.000000e+00 : f32
    %10 = vector.broadcast %cst_9 : f32 to vector<2x32xf32>
    %11 = vector.extract_strided_slice %7 {offsets = [0, 0, 0], sizes = [2, 1, 128], strides = [1, 1, 1]} : vector<2x8x128xf32> to vector<2x1x128xf32>
    %12 = vector.shape_cast %11 : vector<2x1x128xf32> to vector<2x128xf32>
    %cst_10 = arith.constant dense<0.000000e+00> : vector<2x128xf32>
    %13 = tpu.matmul %9, %8, %cst_10 {dimension_numbers = #tpu.dot_dimension_numbers<[1], [0], [0], [1], [0, 0, 1, 1], [], []>} : vector<2x32xf32>, vector<32x128xf32>, vector<2x128xf32> -> vector<2x128xf32>
    %14 = arith.addf %12, %13 : vector<2x128xf32>
    %15 = vector.extract_strided_slice %14 {offsets = [0, 0], sizes = [2, 32], strides = [1, 1]} : vector<2x128xf32> to vector<2x32xf32>
    %16 = arith.negf %15 : vector<2x32xf32>
    %17 = math.exp %16 : vector<2x32xf32>
    %cst_11 = arith.constant 1.000000e+00 : f32
    %18 = vector.broadcast %cst_11 : f32 to vector<2x32xf32>
    %19 = arith.addf %18, %17 : vector<2x32xf32>
    %20 = arith.divf %18, %19 : vector<2x32xf32>
    %21 = vector.extract_strided_slice %14 {offsets = [0, 32], sizes = [2, 32], strides = [1, 1]} : vector<2x128xf32> to vector<2x32xf32>
    %22 = arith.negf %21 : vector<2x32xf32>
    %23 = math.exp %22 : vector<2x32xf32>
    %cst_12 = arith.constant 1.000000e+00 : f32
    %24 = vector.broadcast %cst_12 : f32 to vector<2x32xf32>
    %25 = arith.addf %24, %23 : vector<2x32xf32>
    %26 = arith.divf %24, %25 : vector<2x32xf32>
    %27 = vector.extract_strided_slice %14 {offsets = [0, 64], sizes = [2, 32], strides = [1, 1]} : vector<2x128xf32> to vector<2x32xf32>
    %28 = math.tanh %27 : vector<2x32xf32>
    %29 = vector.extract_strided_slice %14 {offsets = [0, 96], sizes = [2, 32], strides = [1, 1]} : vector<2x128xf32> to vector<2x32xf32>
    %30 = arith.negf %29 : vector<2x32xf32>
    %31 = math.exp %30 : vector<2x32xf32>
    %cst_13 = arith.constant 1.000000e+00 : f32
    %32 = vector.broadcast %cst_13 : f32 to vector<2x32xf32>
    %33 = arith.addf %32, %31 : vector<2x32xf32>
    %34 = arith.divf %32, %33 : vector<2x32xf32>
    %35 = arith.mulf %26, %10 : vector<2x32xf32>
    %36 = arith.mulf %20, %28 : vector<2x32xf32>
    %37 = arith.addf %35, %36 : vector<2x32xf32>
    %38 = math.tanh %37 : vector<2x32xf32>
    %39 = arith.mulf %34, %38 : vector<2x32xf32>
    %c0_14 = arith.constant 0 : index
    %c0_15 = arith.constant 0 : index
    %c0_16 = arith.constant 0 : index
    %40 = vector.load %arg10[%c0_14, %c0_15, %c0_16] : memref<8x2x32xf32, #tpu.memory_space<vmem>>, vector<1x2x32xf32>
    %41 = vector.shape_cast %40 : vector<1x2x32xf32> to vector<2x32xf32>
    %42 = vector.shape_cast %39 : vector<2x32xf32> to vector<1x2x32xf32>
    tpu.vector_store %arg10[%c0_14, %c0_15, %c0_16], %42 {strides = array<i32>} : memref<8x2x32xf32, #tpu.memory_space<vmem>>, vector<1x2x32xf32>,
    %43 = vector.extract_strided_slice %7 {offsets = [0, 1, 0], sizes = [2, 1, 128], strides = [1, 1, 1]} : vector<2x8x128xf32> to vector<2x1x128xf32>
    %44 = vector.shape_cast %43 : vector<2x1x128xf32> to vector<2x128xf32>
    %cst_17 = arith.constant dense<0.000000e+00> : vector<2x128xf32>
    %45 = tpu.matmul %39, %8, %cst_17 {dimension_numbers = #tpu.dot_dimension_numbers<[1], [0], [0], [1], [0, 0, 1, 1], [], []>} : vector<2x32xf32>, vector<32x128xf32>, vector<2x128xf32> -> vector<2x128xf32>
    %46 = arith.addf %44, %45 : vector<2x128xf32>
    %47 = vector.extract_strided_slice %46 {offsets = [0, 0], sizes = [2, 32], strides = [1, 1]} : vector<2x128xf32> to vector<2x32xf32>
    %48 = arith.negf %47 : vector<2x32xf32>
    %49 = math.exp %48 : vector<2x32xf32>
    %cst_18 = arith.constant 1.000000e+00 : f32
    %50 = vector.broadcast %cst_18 : f32 to vector<2x32xf32>
    %51 = arith.addf %50, %49 : vector<2x32xf32>
    %52 = arith.divf %50, %51 : vector<2x32xf32>
    %53 = vector.extract_strided_slice %46 {offsets = [0, 32], sizes = [2, 32], strides = [1, 1]} : vector<2x128xf32> to vector<2x32xf32>
    %54 = arith.negf %53 : vector<2x32xf32>
    %55 = math.exp %54 : vector<2x32xf32>
    %cst_19 = arith.constant 1.000000e+00 : f32
    %56 = vector.broadcast %cst_19 : f32 to vector<2x32xf32>
    %57 = arith.addf %56, %55 : vector<2x32xf32>
    %58 = arith.divf %56, %57 : vector<2x32xf32>
    %59 = vector.extract_strided_slice %46 {offsets = [0, 64], sizes = [2, 32], strides = [1, 1]} : vector<2x128xf32> to vector<2x32xf32>
    %60 = math.tanh %59 : vector<2x32xf32>
    %61 = vector.extract_strided_slice %46 {offsets = [0, 96], sizes = [2, 32], strides = [1, 1]} : vector<2x128xf32> to vector<2x32xf32>
    %62 = arith.negf %61 : vector<2x32xf32>
    %63 = math.exp %62 : vector<2x32xf32>
    %cst_20 = arith.constant 1.000000e+00 : f32
    %64 = vector.broadcast %cst_20 : f32 to vector<2x32xf32>
    %65 = arith.addf %64, %63 : vector<2x32xf32>
    %66 = arith.divf %64, %65 : vector<2x32xf32>
    %67 = arith.mulf %58, %37 : vector<2x32xf32>
    %68 = arith.mulf %52, %60 : vector<2x32xf32>
    %69 = arith.addf %67, %68 : vector<2x32xf32>
    %70 = math.tanh %69 : vector<2x32xf32>
    %71 = arith.mulf %66, %70 : vector<2x32xf32>
    %c1 = arith.constant 1 : index
    %c0_21 = arith.constant 0 : index
    %c0_22 = arith.constant 0 : index
    %72 = vector.load %arg10[%c1, %c0_21, %c0_22] : memref<8x2x32xf32, #tpu.memory_space<vmem>>, vector<1x2x32xf32>
    %73 = vector.shape_cast %72 : vector<1x2x32xf32> to vector<2x32xf32>
    %74 = vector.shape_cast %71 : vector<2x32xf32> to vector<1x2x32xf32>
    tpu.vector_store %arg10[%c1, %c0_21, %c0_22], %74 {strides = array<i32>} : memref<8x2x32xf32, #tpu.memory_space<vmem>>, vector<1x2x32xf32>,
    %75 = vector.extract_strided_slice %7 {offsets = [0, 2, 0], sizes = [2, 1, 128], strides = [1, 1, 1]} : vector<2x8x128xf32> to vector<2x1x128xf32>
    %76 = vector.shape_cast %75 : vector<2x1x128xf32> to vector<2x128xf32>
    %cst_23 = arith.constant dense<0.000000e+00> : vector<2x128xf32>
    %77 = tpu.matmul %71, %8, %cst_23 {dimension_numbers = #tpu.dot_dimension_numbers<[1], [0], [0], [1], [0, 0, 1, 1], [], []>} : vector<2x32xf32>, vector<32x128xf32>, vector<2x128xf32> -> vector<2x128xf32>
    %78 = arith.addf %76, %77 : vector<2x128xf32>
    %79 = vector.extract_strided_slice %78 {offsets = [0, 0], sizes = [2, 32], strides = [1, 1]} : vector<2x128xf32> to vector<2x32xf32>
    %80 = arith.negf %79 : vector<2x32xf32>
    %81 = math.exp %80 : vector<2x32xf32>
    %cst_24 = arith.constant 1.000000e+00 : f32
    %82 = vector.broadcast %cst_24 : f32 to vector<2x32xf32>
    %83 = arith.addf %82, %81 : vector<2x32xf32>
    %84 = arith.divf %82, %83 : vector<2x32xf32>
    %85 = vector.extract_strided_slice %78 {offsets = [0, 32], sizes = [2, 32], strides = [1, 1]} : vector<2x128xf32> to vector<2x32xf32>
    %86 = arith.negf %85 : vector<2x32xf32>
    %87 = math.exp %86 : vector<2x32xf32>
    %cst_25 = arith.constant 1.000000e+00 : f32
    %88 = vector.broadcast %cst_25 : f32 to vector<2x32xf32>
    %89 = arith.addf %88, %87 : vector<2x32xf32>
    %90 = arith.divf %88, %89 : vector<2x32xf32>
    %91 = vector.extract_strided_slice %78 {offsets = [0, 64], sizes = [2, 32], strides = [1, 1]} : vector<2x128xf32> to vector<2x32xf32>
    %92 = math.tanh %91 : vector<2x32xf32>
    %93 = vector.extract_strided_slice %78 {offsets = [0, 96], sizes = [2, 32], strides = [1, 1]} : vector<2x128xf32> to vector<2x32xf32>
    %94 = arith.negf %93 : vector<2x32xf32>
    %95 = math.exp %94 : vector<2x32xf32>
    %cst_26 = arith.constant 1.000000e+00 : f32
    %96 = vector.broadcast %cst_26 : f32 to vector<2x32xf32>
    %97 = arith.addf %96, %95 : vector<2x32xf32>
    %98 = arith.divf %96, %97 : vector<2x32xf32>
    %99 = arith.mulf %90, %69 : vector<2x32xf32>
    %100 = arith.mulf %84, %92 : vector<2x32xf32>
    %101 = arith.addf %99, %100 : vector<2x32xf32>
    %102 = math.tanh %101 : vector<2x32xf32>
    %103 = arith.mulf %98, %102 : vector<2x32xf32>
    %c2 = arith.constant 2 : index
    %c0_27 = arith.constant 0 : index
    %c0_28 = arith.constant 0 : index
    %104 = vector.load %arg10[%c2, %c0_27, %c0_28] : memref<8x2x32xf32, #tpu.memory_space<vmem>>, vector<1x2x32xf32>
    %105 = vector.shape_cast %104 : vector<1x2x32xf32> to vector<2x32xf32>
    %106 = vector.shape_cast %103 : vector<2x32xf32> to vector<1x2x32xf32>
    tpu.vector_store %arg10[%c2, %c0_27, %c0_28], %106 {strides = array<i32>} : memref<8x2x32xf32, #tpu.memory_space<vmem>>, vector<1x2x32xf32>,
    %107 = vector.extract_strided_slice %7 {offsets = [0, 3, 0], sizes = [2, 1, 128], strides = [1, 1, 1]} : vector<2x8x128xf32> to vector<2x1x128xf32>
    %108 = vector.shape_cast %107 : vector<2x1x128xf32> to vector<2x128xf32>
    %cst_29 = arith.constant dense<0.000000e+00> : vector<2x128xf32>
    %109 = tpu.matmul %103, %8, %cst_29 {dimension_numbers = #tpu.dot_dimension_numbers<[1], [0], [0], [1], [0, 0, 1, 1], [], []>} : vector<2x32xf32>, vector<32x128xf32>, vector<2x128xf32> -> vector<2x128xf32>
    %110 = arith.addf %108, %109 : vector<2x128xf32>
    %111 = vector.extract_strided_slice %110 {offsets = [0, 0], sizes = [2, 32], strides = [1, 1]} : vector<2x128xf32> to vector<2x32xf32>
    %112 = arith.negf %111 : vector<2x32xf32>
    %113 = math.exp %112 : vector<2x32xf32>
    %cst_30 = arith.constant 1.000000e+00 : f32
    %114 = vector.broadcast %cst_30 : f32 to vector<2x32xf32>
    %115 = arith.addf %114, %113 : vector<2x32xf32>
    %116 = arith.divf %114, %115 : vector<2x32xf32>
    %117 = vector.extract_strided_slice %110 {offsets = [0, 32], sizes = [2, 32], strides = [1, 1]} : vector<2x128xf32> to vector<2x32xf32>
    %118 = arith.negf %117 : vector<2x32xf32>
    %119 = math.exp %118 : vector<2x32xf32>
    %cst_31 = arith.constant 1.000000e+00 : f32
    %120 = vector.broadcast %cst_31 : f32 to vector<2x32xf32>
    %121 = arith.addf %120, %119 : vector<2x32xf32>
    %122 = arith.divf %120, %121 : vector<2x32xf32>
    %123 = vector.extract_strided_slice %110 {offsets = [0, 64], sizes = [2, 32], strides = [1, 1]} : vector<2x128xf32> to vector<2x32xf32>
    %124 = math.tanh %123 : vector<2x32xf32>
    %125 = vector.extract_strided_slice %110 {offsets = [0, 96], sizes = [2, 32], strides = [1, 1]} : vector<2x128xf32> to vector<2x32xf32>
    %126 = arith.negf %125 : vector<2x32xf32>
    %127 = math.exp %126 : vector<2x32xf32>
    %cst_32 = arith.constant 1.000000e+00 : f32
    %128 = vector.broadcast %cst_32 : f32 to vector<2x32xf32>
    %129 = arith.addf %128, %127 : vector<2x32xf32>
    %130 = arith.divf %128, %129 : vector<2x32xf32>
    %131 = arith.mulf %122, %101 : vector<2x32xf32>
    %132 = arith.mulf %116, %124 : vector<2x32xf32>
    %133 = arith.addf %131, %132 : vector<2x32xf32>
    %134 = math.tanh %133 : vector<2x32xf32>
    %135 = arith.mulf %130, %134 : vector<2x32xf32>
    %c3 = arith.constant 3 : index
    %c0_33 = arith.constant 0 : index
    %c0_34 = arith.constant 0 : index
    %136 = vector.load %arg10[%c3, %c0_33, %c0_34] : memref<8x2x32xf32, #tpu.memory_space<vmem>>, vector<1x2x32xf32>
    %137 = vector.shape_cast %136 : vector<1x2x32xf32> to vector<2x32xf32>
    %138 = vector.shape_cast %135 : vector<2x32xf32> to vector<1x2x32xf32>
    tpu.vector_store %arg10[%c3, %c0_33, %c0_34], %138 {strides = array<i32>} : memref<8x2x32xf32, #tpu.memory_space<vmem>>, vector<1x2x32xf32>,
    %139 = vector.extract_strided_slice %7 {offsets = [0, 4, 0], sizes = [2, 1, 128], strides = [1, 1, 1]} : vector<2x8x128xf32> to vector<2x1x128xf32>
    %140 = vector.shape_cast %139 : vector<2x1x128xf32> to vector<2x128xf32>
    %cst_35 = arith.constant dense<0.000000e+00> : vector<2x128xf32>
    %141 = tpu.matmul %135, %8, %cst_35 {dimension_numbers = #tpu.dot_dimension_numbers<[1], [0], [0], [1], [0, 0, 1, 1], [], []>} : vector<2x32xf32>, vector<32x128xf32>, vector<2x128xf32> -> vector<2x128xf32>
    %142 = arith.addf %140, %141 : vector<2x128xf32>
    %143 = vector.extract_strided_slice %142 {offsets = [0, 0], sizes = [2, 32], strides = [1, 1]} : vector<2x128xf32> to vector<2x32xf32>
    %144 = arith.negf %143 : vector<2x32xf32>
    %145 = math.exp %144 : vector<2x32xf32>
    %cst_36 = arith.constant 1.000000e+00 : f32
    %146 = vector.broadcast %cst_36 : f32 to vector<2x32xf32>
    %147 = arith.addf %146, %145 : vector<2x32xf32>
    %148 = arith.divf %146, %147 : vector<2x32xf32>
    %149 = vector.extract_strided_slice %142 {offsets = [0, 32], sizes = [2, 32], strides = [1, 1]} : vector<2x128xf32> to vector<2x32xf32>
    %150 = arith.negf %149 : vector<2x32xf32>
    %151 = math.exp %150 : vector<2x32xf32>
    %cst_37 = arith.constant 1.000000e+00 : f32
    %152 = vector.broadcast %cst_37 : f32 to vector<2x32xf32>
    %153 = arith.addf %152, %151 : vector<2x32xf32>
    %154 = arith.divf %152, %153 : vector<2x32xf32>
    %155 = vector.extract_strided_slice %142 {offsets = [0, 64], sizes = [2, 32], strides = [1, 1]} : vector<2x128xf32> to vector<2x32xf32>
    %156 = math.tanh %155 : vector<2x32xf32>
    %157 = vector.extract_strided_slice %142 {offsets = [0, 96], sizes = [2, 32], strides = [1, 1]} : vector<2x128xf32> to vector<2x32xf32>
    %158 = arith.negf %157 : vector<2x32xf32>
    %159 = math.exp %158 : vector<2x32xf32>
    %cst_38 = arith.constant 1.000000e+00 : f32
    %160 = vector.broadcast %cst_38 : f32 to vector<2x32xf32>
    %161 = arith.addf %160, %159 : vector<2x32xf32>
    %162 = arith.divf %160, %161 : vector<2x32xf32>
    %163 = arith.mulf %154, %133 : vector<2x32xf32>
    %164 = arith.mulf %148, %156 : vector<2x32xf32>
    %165 = arith.addf %163, %164 : vector<2x32xf32>
    %166 = math.tanh %165 : vector<2x32xf32>
    %167 = arith.mulf %162, %166 : vector<2x32xf32>
    %c4 = arith.constant 4 : index
    %c0_39 = arith.constant 0 : index
    %c0_40 = arith.constant 0 : index
    %168 = vector.load %arg10[%c4, %c0_39, %c0_40] : memref<8x2x32xf32, #tpu.memory_space<vmem>>, vector<1x2x32xf32>
    %169 = vector.shape_cast %168 : vector<1x2x32xf32> to vector<2x32xf32>
    %170 = vector.shape_cast %167 : vector<2x32xf32> to vector<1x2x32xf32>
    tpu.vector_store %arg10[%c4, %c0_39, %c0_40], %170 {strides = array<i32>} : memref<8x2x32xf32, #tpu.memory_space<vmem>>, vector<1x2x32xf32>,
    %171 = vector.extract_strided_slice %7 {offsets = [0, 5, 0], sizes = [2, 1, 128], strides = [1, 1, 1]} : vector<2x8x128xf32> to vector<2x1x128xf32>
    %172 = vector.shape_cast %171 : vector<2x1x128xf32> to vector<2x128xf32>
    %cst_41 = arith.constant dense<0.000000e+00> : vector<2x128xf32>
    %173 = tpu.matmul %167, %8, %cst_41 {dimension_numbers = #tpu.dot_dimension_numbers<[1], [0], [0], [1], [0, 0, 1, 1], [], []>} : vector<2x32xf32>, vector<32x128xf32>, vector<2x128xf32> -> vector<2x128xf32>
    %174 = arith.addf %172, %173 : vector<2x128xf32>
    %175 = vector.extract_strided_slice %174 {offsets = [0, 0], sizes = [2, 32], strides = [1, 1]} : vector<2x128xf32> to vector<2x32xf32>
    %176 = arith.negf %175 : vector<2x32xf32>
    %177 = math.exp %176 : vector<2x32xf32>
    %cst_42 = arith.constant 1.000000e+00 : f32
    %178 = vector.broadcast %cst_42 : f32 to vector<2x32xf32>
    %179 = arith.addf %178, %177 : vector<2x32xf32>
    %180 = arith.divf %178, %179 : vector<2x32xf32>
    %181 = vector.extract_strided_slice %174 {offsets = [0, 32], sizes = [2, 32], strides = [1, 1]} : vector<2x128xf32> to vector<2x32xf32>
    %182 = arith.negf %181 : vector<2x32xf32>
    %183 = math.exp %182 : vector<2x32xf32>
    %cst_43 = arith.constant 1.000000e+00 : f32
    %184 = vector.broadcast %cst_43 : f32 to vector<2x32xf32>
    %185 = arith.addf %184, %183 : vector<2x32xf32>
    %186 = arith.divf %184, %185 : vector<2x32xf32>
    %187 = vector.extract_strided_slice %174 {offsets = [0, 64], sizes = [2, 32], strides = [1, 1]} : vector<2x128xf32> to vector<2x32xf32>
    %188 = math.tanh %187 : vector<2x32xf32>
    %189 = vector.extract_strided_slice %174 {offsets = [0, 96], sizes = [2, 32], strides = [1, 1]} : vector<2x128xf32> to vector<2x32xf32>
    %190 = arith.negf %189 : vector<2x32xf32>
    %191 = math.exp %190 : vector<2x32xf32>
    %cst_44 = arith.constant 1.000000e+00 : f32
    %192 = vector.broadcast %cst_44 : f32 to vector<2x32xf32>
    %193 = arith.addf %192, %191 : vector<2x32xf32>
    %194 = arith.divf %192, %193 : vector<2x32xf32>
    %195 = arith.mulf %186, %165 : vector<2x32xf32>
    %196 = arith.mulf %180, %188 : vector<2x32xf32>
    %197 = arith.addf %195, %196 : vector<2x32xf32>
    %198 = math.tanh %197 : vector<2x32xf32>
    %199 = arith.mulf %194, %198 : vector<2x32xf32>
    %c5 = arith.constant 5 : index
    %c0_45 = arith.constant 0 : index
    %c0_46 = arith.constant 0 : index
    %200 = vector.load %arg10[%c5, %c0_45, %c0_46] : memref<8x2x32xf32, #tpu.memory_space<vmem>>, vector<1x2x32xf32>
    %201 = vector.shape_cast %200 : vector<1x2x32xf32> to vector<2x32xf32>
    %202 = vector.shape_cast %199 : vector<2x32xf32> to vector<1x2x32xf32>
    tpu.vector_store %arg10[%c5, %c0_45, %c0_46], %202 {strides = array<i32>} : memref<8x2x32xf32, #tpu.memory_space<vmem>>, vector<1x2x32xf32>,
    %203 = vector.extract_strided_slice %7 {offsets = [0, 6, 0], sizes = [2, 1, 128], strides = [1, 1, 1]} : vector<2x8x128xf32> to vector<2x1x128xf32>
    %204 = vector.shape_cast %203 : vector<2x1x128xf32> to vector<2x128xf32>
    %cst_47 = arith.constant dense<0.000000e+00> : vector<2x128xf32>
    %205 = tpu.matmul %199, %8, %cst_47 {dimension_numbers = #tpu.dot_dimension_numbers<[1], [0], [0], [1], [0, 0, 1, 1], [], []>} : vector<2x32xf32>, vector<32x128xf32>, vector<2x128xf32> -> vector<2x128xf32>
    %206 = arith.addf %204, %205 : vector<2x128xf32>
    %207 = vector.extract_strided_slice %206 {offsets = [0, 0], sizes = [2, 32], strides = [1, 1]} : vector<2x128xf32> to vector<2x32xf32>
    %208 = arith.negf %207 : vector<2x32xf32>
    %209 = math.exp %208 : vector<2x32xf32>
    %cst_48 = arith.constant 1.000000e+00 : f32
    %210 = vector.broadcast %cst_48 : f32 to vector<2x32xf32>
    %211 = arith.addf %210, %209 : vector<2x32xf32>
    %212 = arith.divf %210, %211 : vector<2x32xf32>
    %213 = vector.extract_strided_slice %206 {offsets = [0, 32], sizes = [2, 32], strides = [1, 1]} : vector<2x128xf32> to vector<2x32xf32>
    %214 = arith.negf %213 : vector<2x32xf32>
    %215 = math.exp %214 : vector<2x32xf32>
    %cst_49 = arith.constant 1.000000e+00 : f32
    %216 = vector.broadcast %cst_49 : f32 to vector<2x32xf32>
    %217 = arith.addf %216, %215 : vector<2x32xf32>
    %218 = arith.divf %216, %217 : vector<2x32xf32>
    %219 = vector.extract_strided_slice %206 {offsets = [0, 64], sizes = [2, 32], strides = [1, 1]} : vector<2x128xf32> to vector<2x32xf32>
    %220 = math.tanh %219 : vector<2x32xf32>
    %221 = vector.extract_strided_slice %206 {offsets = [0, 96], sizes = [2, 32], strides = [1, 1]} : vector<2x128xf32> to vector<2x32xf32>
    %222 = arith.negf %221 : vector<2x32xf32>
    %223 = math.exp %222 : vector<2x32xf32>
    %cst_50 = arith.constant 1.000000e+00 : f32
    %224 = vector.broadcast %cst_50 : f32 to vector<2x32xf32>
    %225 = arith.addf %224, %223 : vector<2x32xf32>
    %226 = arith.divf %224, %225 : vector<2x32xf32>
    %227 = arith.mulf %218, %197 : vector<2x32xf32>
    %228 = arith.mulf %212, %220 : vector<2x32xf32>
    %229 = arith.addf %227, %228 : vector<2x32xf32>
    %230 = math.tanh %229 : vector<2x32xf32>
    %231 = arith.mulf %226, %230 : vector<2x32xf32>
    %c6 = arith.constant 6 : index
    %c0_51 = arith.constant 0 : index
    %c0_52 = arith.constant 0 : index
    %232 = vector.load %arg10[%c6, %c0_51, %c0_52] : memref<8x2x32xf32, #tpu.memory_space<vmem>>, vector<1x2x32xf32>
    %233 = vector.shape_cast %232 : vector<1x2x32xf32> to vector<2x32xf32>
    %234 = vector.shape_cast %231 : vector<2x32xf32> to vector<1x2x32xf32>
    tpu.vector_store %arg10[%c6, %c0_51, %c0_52], %234 {strides = array<i32>} : memref<8x2x32xf32, #tpu.memory_space<vmem>>, vector<1x2x32xf32>,
    %235 = vector.extract_strided_slice %7 {offsets = [0, 7, 0], sizes = [2, 1, 128], strides = [1, 1, 1]} : vector<2x8x128xf32> to vector<2x1x128xf32>
    %236 = vector.shape_cast %235 : vector<2x1x128xf32> to vector<2x128xf32>
    %cst_53 = arith.constant dense<0.000000e+00> : vector<2x128xf32>
    %237 = tpu.matmul %231, %8, %cst_53 {dimension_numbers = #tpu.dot_dimension_numbers<[1], [0], [0], [1], [0, 0, 1, 1], [], []>} : vector<2x32xf32>, vector<32x128xf32>, vector<2x128xf32> -> vector<2x128xf32>
    %238 = arith.addf %236, %237 : vector<2x128xf32>
    %239 = vector.extract_strided_slice %238 {offsets = [0, 0], sizes = [2, 32], strides = [1, 1]} : vector<2x128xf32> to vector<2x32xf32>
    %240 = arith.negf %239 : vector<2x32xf32>
    %241 = math.exp %240 : vector<2x32xf32>
    %cst_54 = arith.constant 1.000000e+00 : f32
    %242 = vector.broadcast %cst_54 : f32 to vector<2x32xf32>
    %243 = arith.addf %242, %241 : vector<2x32xf32>
    %244 = arith.divf %242, %243 : vector<2x32xf32>
    %245 = vector.extract_strided_slice %238 {offsets = [0, 32], sizes = [2, 32], strides = [1, 1]} : vector<2x128xf32> to vector<2x32xf32>
    %246 = arith.negf %245 : vector<2x32xf32>
    %247 = math.exp %246 : vector<2x32xf32>
    %cst_55 = arith.constant 1.000000e+00 : f32
    %248 = vector.broadcast %cst_55 : f32 to vector<2x32xf32>
    %249 = arith.addf %248, %247 : vector<2x32xf32>
    %250 = arith.divf %248, %249 : vector<2x32xf32>
    %251 = vector.extract_strided_slice %238 {offsets = [0, 64], sizes = [2, 32], strides = [1, 1]} : vector<2x128xf32> to vector<2x32xf32>
    %252 = math.tanh %251 : vector<2x32xf32>
    %253 = vector.extract_strided_slice %238 {offsets = [0, 96], sizes = [2, 32], strides = [1, 1]} : vector<2x128xf32> to vector<2x32xf32>
    %254 = arith.negf %253 : vector<2x32xf32>
    %255 = math.exp %254 : vector<2x32xf32>
    %cst_56 = arith.constant 1.000000e+00 : f32
    %256 = vector.broadcast %cst_56 : f32 to vector<2x32xf32>
    %257 = arith.addf %256, %255 : vector<2x32xf32>
    %258 = arith.divf %256, %257 : vector<2x32xf32>
    %259 = arith.mulf %250, %229 : vector<2x32xf32>
    %260 = arith.mulf %244, %252 : vector<2x32xf32>
    %261 = arith.addf %259, %260 : vector<2x32xf32>
    %262 = math.tanh %261 : vector<2x32xf32>
    %263 = arith.mulf %258, %262 : vector<2x32xf32>
    %c7 = arith.constant 7 : index
    %c0_57 = arith.constant 0 : index
    %c0_58 = arith.constant 0 : index
    %264 = vector.load %arg10[%c7, %c0_57, %c0_58] : memref<8x2x32xf32, #tpu.memory_space<vmem>>, vector<1x2x32xf32>
    %265 = vector.shape_cast %264 : vector<1x2x32xf32> to vector<2x32xf32>
    %266 = vector.shape_cast %263 : vector<2x32xf32> to vector<1x2x32xf32>
    tpu.vector_store %arg10[%c7, %c0_57, %c0_58], %266 {strides = array<i32>} : memref<8x2x32xf32, #tpu.memory_space<vmem>>, vector<1x2x32xf32>,
    %c0_59 = arith.constant 0 : index
    %c0_60 = arith.constant 0 : index
    %c0_61 = arith.constant 0 : index
    %267 = vector.load %arg10[%c0_59, %c0_60, %c0_61] : memref<8x2x32xf32, #tpu.memory_space<vmem>>, vector<8x2x32xf32>
    %268 = vector.shape_cast %267 : vector<8x2x32xf32> to vector<16x32xf32>
    %c0_62 = arith.constant 0 : index
    %c0_63 = arith.constant 0 : index
    %269 = vector.load %arg4[%c0_62, %c0_63] : memref<32x32xf32, #tpu.memory_space<vmem>>, vector<32x32xf32>
    %cst_64 = arith.constant dense<0.000000e+00> : vector<16x32xf32>
    %270 = tpu.matmul %268, %269, %cst_64 {dimension_numbers = #tpu.dot_dimension_numbers<[1], [0], [0], [1], [0, 0, 1, 1], [], []>} : vector<16x32xf32>, vector<32x32xf32>, vector<16x32xf32> -> vector<16x32xf32>
    %c0_65 = arith.constant 0 : index
    %c0_66 = arith.constant 0 : index
    %271 = vector.load %arg5[%c0_65, %c0_66] : memref<1x32xf32, #tpu.memory_space<vmem>>, vector<1x32xf32>
    %272 = vector.broadcast %271 : vector<1x32xf32> to vector<16x32xf32>
    %273 = arith.addf %270, %272 : vector<16x32xf32>
    %274 = math.tanh %273 : vector<16x32xf32>
    %275 = vector.shape_cast %274 : vector<16x32xf32> to vector<8x2x32xf32>
    %c0_67 = arith.constant 0 : index
    %c0_68 = arith.constant 0 : index
    %276 = vector.load %arg6[%c0_67, %c0_68] : memref<1x32xf32, #tpu.memory_space<vmem>>, vector<1x32xf32>
    %277 = vector.shape_cast %276 : vector<1x32xf32> to vector<1x1x32xf32>
    %278 = vector.broadcast %277 : vector<1x1x32xf32> to vector<8x2x32xf32>
    %279 = arith.mulf %275, %278 : vector<8x2x32xf32>
    %cst_69 = arith.constant dense<0.000000e+00> : vector<8x2xf32>
    %280 = vector.multi_reduction <add>, %279, %cst_69 [2] : vector<8x2x32xf32> to vector<8x2xf32>
    %281 = vector.shape_cast %280 : vector<8x2xf32> to vector<8x2x1xf32>
    %cst_70 = arith.constant dense<0xFF800000> : vector<2x1xf32>
    %282 = vector.multi_reduction <maximumf>, %281, %cst_70 [0] : vector<8x2x1xf32> to vector<2x1xf32>
    %283 = vector.shape_cast %282 : vector<2x1xf32> to vector<1x2x1xf32>
    %284 = vector.broadcast %283 : vector<1x2x1xf32> to vector<8x2x1xf32>
    %285 = arith.subf %281, %284 : vector<8x2x1xf32>
    %286 = math.exp %285 : vector<8x2x1xf32>
    %cst_71 = arith.constant dense<0.000000e+00> : vector<2x1xf32>
    %287 = vector.multi_reduction <add>, %286, %cst_71 [0] : vector<8x2x1xf32> to vector<2x1xf32>
    %288 = vector.shape_cast %287 : vector<2x1xf32> to vector<1x2x1xf32>
    %289 = tpu.reciprocal %288 {approx = true} : vector<1x2x1xf32> -> vector<1x2x1xf32>
    %290 = vector.broadcast %289 : vector<1x2x1xf32> to vector<8x2x1xf32>
    %291 = arith.mulf %286, %290 : vector<8x2x1xf32>
    %292 = vector.broadcast %291 : vector<8x2x1xf32> to vector<8x2x32xf32>
    %293 = arith.mulf %267, %292 : vector<8x2x32xf32>
    %cst_72 = arith.constant dense<0.000000e+00> : vector<2x32xf32>
    %294 = vector.multi_reduction <add>, %293, %cst_72 [0] : vector<8x2x32xf32> to vector<2x32xf32>
    %c0_73 = arith.constant 0 : index
    %c0_74 = arith.constant 0 : index
    %295 = vector.load %arg7[%c0_73, %c0_74] : memref<32x4xf32, #tpu.memory_space<vmem>>, vector<32x4xf32>
    %cst_75 = arith.constant dense<0.000000e+00> : vector<2x4xf32>
    %296 = tpu.matmul %294, %295, %cst_75 {dimension_numbers = #tpu.dot_dimension_numbers<[1], [0], [0], [1], [0, 0, 1, 1], [], []>} : vector<2x32xf32>, vector<32x4xf32>, vector<2x4xf32> -> vector<2x4xf32>
    %c0_76 = arith.constant 0 : index
    %c0_77 = arith.constant 0 : index
    %297 = vector.load %arg8[%c0_76, %c0_77] : memref<1x4xf32, #tpu.memory_space<vmem>>, vector<1x4xf32>
    %298 = vector.broadcast %297 : vector<1x4xf32> to vector<2x4xf32>
    %299 = arith.addf %296, %298 : vector<2x4xf32>
    %cst_78 = arith.constant dense<0xFF800000> : vector<2xf32>
    %300 = vector.multi_reduction <maximumf>, %299, %cst_78 [1] : vector<2x4xf32> to vector<2xf32>
    %301 = vector.shape_cast %300 : vector<2xf32> to vector<2x1xf32>
    %302 = vector.broadcast %301 : vector<2x1xf32> to vector<2x4xf32>
    %303 = arith.subf %299, %302 : vector<2x4xf32>
    %304 = math.exp %303 : vector<2x4xf32>
    %cst_79 = arith.constant dense<0.000000e+00> : vector<2xf32>
    %305 = vector.multi_reduction <add>, %304, %cst_79 [1] : vector<2x4xf32> to vector<2xf32>
    %306 = vector.shape_cast %305 : vector<2xf32> to vector<2x1xf32>
    %307 = tpu.reciprocal %306 : vector<2x1xf32> -> vector<2x1xf32>
    %308 = vector.broadcast %307 : vector<2x1xf32> to vector<2x4xf32>
    %309 = arith.mulf %304, %308 : vector<2x4xf32>
    %c0_80 = arith.constant 0 : index
    %c0_81 = arith.constant 0 : index
    %310 = vector.load %arg9[%c0_80, %c0_81] : memref<2x4xf32, #tpu.memory_space<vmem>>, vector<2x4xf32>
    tpu.vector_store %arg9[%c0_80, %c0_81], %309 {strides = array<i32>} : memref<2x4xf32, #tpu.memory_space<vmem>>, vector<2x4xf32>,
    return
  }
}

</mosaic_0001>

<llo_original>
// kernel: tpu_custom_call.1
$region0: #{tpu_custom_call.1}
  #allocation0 [shape = 'u32[]', space=smem, size = 0x4, offset = 0x4, fixed_abs, tag = 'smem constant byte address 0x4 - core index']
  #allocation1 [shape = 'u32[72,128]{1,0:T(1,128)}', space=vmem, size = 0x9000, scoped, tag = 'internal scratch']
  #allocation2 [shape = 'f32[8,2,32]{2,1,0:T(2,128)}', space=vmem, size = 0x2000, scoped, tag = 'scratch operand']
  %s0 = inlined_call_operand.hbm [shape: f32[2,8,32], index: 0, kind: input, shape index: {}]
  %s1 = inlined_call_operand.vmem [shape: f32[32,128], index: 1, kind: input, shape index: {}]
  %s2 = inlined_call_operand.hbm [shape: f32[32,128], index: 2, kind: input, shape index: {}]
  %s3 = inlined_call_operand.vmem [shape: f32[1,128], index: 3, kind: input, shape index: {}]
  %s4 = inlined_call_operand.hbm [shape: f32[32,32], index: 4, kind: input, shape index: {}]
  %s5 = inlined_call_operand.vmem [shape: f32[1,32], index: 5, kind: input, shape index: {}]
  %s6 = inlined_call_operand.vmem [shape: f32[1,32], index: 6, kind: input, shape index: {}]
  %s7 = inlined_call_operand.vmem [shape: f32[32,4], index: 7, kind: input, shape index: {}]
  %s8 = inlined_call_operand.vmem [shape: f32[1,4], index: 8, kind: input, shape index: {}]
  %s9 = inlined_call_operand.hbm [shape: f32[2,4], index: 9, kind: output, shape index: {}]
  %s10 = sld [smem:[#allocation0]]
  $region58: #{tpu_custom_call.1} parent=0
    _
  %s12 = ssub.s32 1, %s10
  %s13 = scalar_select 0, %s12, %s10
  $region1: #{tpu_custom_call.1} parent=0
    #allocation3 [shape = 'u8[8192]{0}', space=vmem, size = 0x2000, scoped, tag = 'input window, operand 0, single buffered']
    #allocation4 [shape = 's32[1]{0}', space=sflag, size = 0x4, scoped, tag = 'scoped memory for tpu_custom_call.1']
    #allocation5 [shape = 's32[1]{0}', space=sflag, size = 0x4, scoped, tag = 'scoped memory for tpu_custom_call.1']
    #allocation6 [shape = 'u8[16384]{0}', space=vmem, size = 0x4000, scoped, tag = 'input window, operand 2, single buffered']
    #allocation7 [shape = 's32[1]{0}', space=sflag, size = 0x4, scoped, tag = 'scoped memory for tpu_custom_call.1']
    #allocation8 [shape = 'u8[16384]{0}', space=vmem, size = 0x4000, scoped, tag = 'input window, operand 4, single buffered']
    #allocation9 [shape = 'u8[1024]{0}', space=vmem, size = 0x400, scoped, tag = 'output window, operand 0, single buffered']
    %14 = vsyncpa [#allocation4], 0
    %15 = vsyncpa [#allocation7], 0
    %16 = vsyncpa [#allocation5], 0
    // Predicated region
    $region2: #{tpu_custom_call.1} parent=1 // pred_check
      _
    $region3: #{tpu_custom_call.1} parent=1 // pred_check_branch
      %18 = sbr.rel (0) target = $region5
    $region4: #{tpu_custom_call.1} parent=1 // pred_region
      %20 = vsyncadd [#allocation4], 0
      %s21 = sshll.u32 %s0, 4
      %s22 = int_to_ptr.hbm [resolvable:$true] %s21
      %s23 = sshll.u32 [#allocation3], 4
      %s24 = int_to_ptr.vmem [resolvable:$true] %s23
      %29 = dma.hbm_to_vmem [thread:$0]  %s22, 256, %s24, [#allocation4], 128, 128, 8
    $region5: #{tpu_custom_call.1} parent=1 // pred_fallthru
      _
    // Predicated region
    $region6: #{tpu_custom_call.1} parent=1 // pred_check
      _
    $region7: #{tpu_custom_call.1} parent=1 // pred_check_branch
      %31 = sbr.rel (0) target = $region9
    $region8: #{tpu_custom_call.1} parent=1 // pred_region
      _
    $region9: #{tpu_custom_call.1} parent=1 // pred_fallthru
      _
    // Predicated region
    $region10: #{tpu_custom_call.1} parent=1 // pred_check
      _
    $region11: #{tpu_custom_call.1} parent=1 // pred_check_branch
      %33 = sbr.rel (0) target = $region13
    $region12: #{tpu_custom_call.1} parent=1 // pred_region
      %35 = vsyncadd [#allocation7], 0
      %s36 = sshll.u32 %s2, 4
      %s37 = int_to_ptr.hbm [resolvable:$true] %s36
      %s38 = sshll.u32 [#allocation6], 4
      %s39 = int_to_ptr.vmem [resolvable:$true] %s38
      %44 = dma.hbm_to_vmem [thread:$0]  %s37, 512, %s39, [#allocation7], 128, 128, 8
    $region13: #{tpu_custom_call.1} parent=1 // pred_fallthru
      _
    // Predicated region
    $region14: #{tpu_custom_call.1} parent=1 // pred_check
      _
    $region15: #{tpu_custom_call.1} parent=1 // pred_check_branch
      %46 = sbr.rel (0) target = $region17
    $region16: #{tpu_custom_call.1} parent=1 // pred_region
      _
    $region17: #{tpu_custom_call.1} parent=1 // pred_fallthru
      _
    // Predicated region
    $region18: #{tpu_custom_call.1} parent=1 // pred_check
      _
    $region19: #{tpu_custom_call.1} parent=1 // pred_check_branch
      %48 = sbr.rel (0) target = $region21
    $region20: #{tpu_custom_call.1} parent=1 // pred_region
      %50 = vsyncadd [#allocation7], 0
      %s51 = sshll.u32 %s4, 4
      %s52 = int_to_ptr.hbm [resolvable:$true] %s51
      %s53 = sshll.u32 [#allocation8], 4
      %s54 = int_to_ptr.vmem [resolvable:$true] %s53
      %59 = dma.hbm_to_vmem [thread:$0]  %s52, 512, %s54, [#allocation7], 128, 128, 8
    $region21: #{tpu_custom_call.1} parent=1 // pred_fallthru
      _
    // Predicated region
    $region22: #{tpu_custom_call.1} parent=1 // pred_check
      _
    $region23: #{tpu_custom_call.1} parent=1 // pred_check_branch
      %61 = sbr.rel (0) target = $region25
    $region24: #{tpu_custom_call.1} parent=1 // pred_region
      _
    $region25: #{tpu_custom_call.1} parent=1 // pred_fallthru
      _
    // Predicated region
    $region26: #{tpu_custom_call.1} parent=1 // pred_check
      _
    $region27: #{tpu_custom_call.1} parent=1 // pred_check_branch
      %63 = sbr.rel (0) target = $region29
    $region28: #{tpu_custom_call.1} parent=1 // pred_region
      _
    $region29: #{tpu_custom_call.1} parent=1 // pred_fallthru
      _
    // Predicated region
    $region30: #{tpu_custom_call.1} parent=1 // pred_check
      _
    $region31: #{tpu_custom_call.1} parent=1 // pred_check_branch
      %65 = sbr.rel (0) target = $region33
    $region32: #{tpu_custom_call.1} parent=1 // pred_region
      _
    $region33: #{tpu_custom_call.1} parent=1 // pred_fallthru
      _
    // Predicated region
    $region34: #{tpu_custom_call.1} parent=1 // pred_check
      _
    $region35: #{tpu_custom_call.1} parent=1 // pred_check_branch
      %67 = sbr.rel (0) target = $region37
    $region36: #{tpu_custom_call.1} parent=1 // pred_region
      _
    $region37: #{tpu_custom_call.1} parent=1 // pred_fallthru
      _
    // Predicated region
    $region38: #{tpu_custom_call.1} parent=1 // pred_check
      _
    $region39: #{tpu_custom_call.1} parent=1 // pred_check_branch
      %69 = sbr.rel (0) target = $region41
    $region40: #{tpu_custom_call.1} parent=1 // pred_region
      %71 = dma.done [#allocation4], 256
    $region41: #{tpu_custom_call.1} parent=1 // pred_fallthru
      _
    // Predicated region
    $region42: #{tpu_custom_call.1} parent=1 // pred_check
      _
    $region43: #{tpu_custom_call.1} parent=1 // pred_check_branch
      %73 = sbr.rel (0) target = $region45
    $region44: #{tpu_custom_call.1} parent=1 // pred_region
      %75 = dma.done [#allocation7], 512
    $region45: #{tpu_custom_call.1} parent=1 // pred_fallthru
      _
    // Predicated region
    $region46: #{tpu_custom_call.1} parent=1 // pred_check
      _
    $region47: #{tpu_custom_call.1} parent=1 // pred_check_branch
      %77 = sbr.rel (0) target = $region49
    $region48: #{tpu_custom_call.1} parent=1 // pred_region
      %79 = dma.done [#allocation7], 512
    $region49: #{tpu_custom_call.1} parent=1 // pred_fallthru
      _
    %v80 = vld [vmem:[#allocation3] sm:$0xff]
    %v81 = vld [vmem:[#allocation3 + $0x8] sm:$0xff]
    %v82 = vld [vmem:[%s1] sm:$0xff]
    %v83 = vld [vmem:[%s1 + $0x8] sm:$0xff]
    %v84 = vld [vmem:[%s1 + $0x10] sm:$0xff]
    %v85 = vld [vmem:[%s1 + $0x18] sm:$0xff]
    %v86 = vld [vmem:[%s3] sm:$0x1]
    %v88 = vperm.slane %v86, 0
    %vm90 = vcmask 261120
    %v92 = vsel %vm90, %v80, 0
    %v95 = vsel %vm90, %v81, 0
    %97 = vmatpush.msra.mxu0 0.0
    %98 = vmatpush.msra.mxu0 0.0
    %99 = vmatpush.msra.mxu0 0.0
    %100 = vmatpush.msra.mxu0 0.0
    %101 = vmatpush.msra.mxu0 0.0
    %102 = vmatpush.msra.mxu0 0.0
    %103 = vmatpush.msra.mxu0 0.0
    %104 = vmatpush.msra.mxu0 0.0
    %105 = vmatpush.msra.mxu0 0.0
    %106 = vmatpush.msra.mxu0 0.0
    %107 = vmatpush.msra.mxu0 0.0
    %108 = vmatpush.msra.mxu0 0.0
    %109 = vmatpush.msra.mxu0 %v85
    %110 = vmatpush.msra.mxu0 %v84
    %111 = vmatpush.msra.mxu0 %v83
    %112 = vmatpush.msra.mxu0 %v82
    %113 = vmatmul.f32.gmra.mxu0 %v92
    %v114 = vpop.f32.mrf.mxu0
    %v115 = vadd.f32 %v88, %v114
    %116 = vmatmul.f32.gmra.mxu0 %v95
    %v117 = vpop.f32.mrf.mxu0
    %v118 = vadd.f32 %v88, %v117
    %119 = vdwg.mxu0
    %v120 = vld [vmem:[#allocation6] sm:$0xff]
    %v121 = vld [vmem:[#allocation6 + $0x8] sm:$0xff]
    %v122 = vld [vmem:[#allocation6 + $0x10] sm:$0xff]
    %v123 = vld [vmem:[#allocation6 + $0x18] sm:$0xff]
    %v125 = vsel %vm90, 0.0, 0
    %127 = vmatpush.msra.mxu0 0.0
    %128 = vmatpush.msra.mxu0 0.0
    %129 = vmatpush.msra.mxu0 0.0
    %130 = vmatpush.msra.mxu0 0.0
    %131 = vmatpush.msra.mxu0 0.0
    %132 = vmatpush.msra.mxu0 0.0
    %133 = vmatpush.msra.mxu0 0.0
    %134 = vmatpush.msra.mxu0 0.0
    %135 = vmatpush.msra.mxu0 0.0
    %136 = vmatpush.msra.mxu0 0.0
    %137 = vmatpush.msra.mxu0 0.0
    %138 = vmatpush.msra.mxu0 0.0
    %139 = vmatpush.msra.mxu0 %v123
    %140 = vmatpush.msra.mxu0 %v122
    %141 = vmatpush.msra.mxu0 %v121
    %142 = vmatpush.msra.mxu0 %v120
    %143 = vmatmul.f32.gmra.mxu0 %v125
    %v144 = vpop.f32.mrf.mxu0
    %v145 = vadd.f32 0.0, %v144
    %146 = vdwg.mxu0
    %v148 = vrot.slane %v145, 1
    %v151 = vadd.f32 %v115, %v145
    %v152 = vadd.f32 %v118, %v148
    %v153 = vxor.u32 %v151, 2147483648
    %v154 = vxor.u32 %v152, 2147483648
    %v155 = vmul.f32 %v153, 1.442695
    %v156 = vpow.pop %v155
    %v157 = vmul.f32 %v154, 1.442695
    %v158 = vpow.pop %v157
    %v159 = vadd.f32 %v156, 1.0
    %v160 = vadd.f32 %v158, 1.0
    %v161 = vrcp.pop %v159
    %v162 = vmul.f32 %v159, %v161
    %v163 = vsub.f32 1.0, %v162
    %v164 = vmul.f32 %v161, %v163
    %v165 = vadd.f32 %v161, %v164
    %vm166 = vweird.f32 %v159
    %vm167 = vweird.f32 %v161
    %vm168 = vmor %vm166, %vm167
    %v169 = vsel %vm168, %v161, %v165
    %v170 = vand.u32 2147483647, %v159
    %vm171 = vcmp.eq.f32.partialorder %v170, 8.507059e+37
    %v172 = vand.u32 %v159, 2147483648
    %v173 = vor.u32 1.1754944e-38, %v172
    %v174 = vsel %vm171, %v173, %v169
    %v175 = vmul.f32 1.0, %v174
    %v176 = vrcp.pop %v160
    %v177 = vmul.f32 %v160, %v176
    %v178 = vsub.f32 1.0, %v177
    %v179 = vmul.f32 %v176, %v178
    %v180 = vadd.f32 %v176, %v179
    %vm181 = vweird.f32 %v160
    %vm182 = vweird.f32 %v176
    %vm183 = vmor %vm181, %vm182
    %v184 = vsel %vm183, %v176, %v180
    %v185 = vand.u32 2147483647, %v160
    %vm186 = vcmp.eq.f32.partialorder %v185, 8.507059e+37
    %v187 = vand.u32 %v160, 2147483648
    %v188 = vor.u32 1.1754944e-38, %v187
    %v189 = vsel %vm186, %v188, %v184
    %v190 = vmul.f32 1.0, %v189
    %v191 = vtanh.pop %v151
    %v192 = vtanh.pop %v152
    %v193 = vmul.f32 %v175, 0.0
    %v194 = vmul.f32 %v190, 0.0
    %197 = vrot.lane.b32.xlu0 %v191, 64
    %v198 = vpop.permute.xlu0 %197
    %199 = vrot.lane.b32.xlu0 %v192, 64
    %v200 = vpop.permute.xlu0 %199
    %v203 = vmul.f32 %v175, %v198
    %v204 = vmul.f32 %v190, %v200
    %207 = vrot.lane.b32.xlu0 %v203, 32
    %v208 = vpop.permute.xlu0 %207
    %209 = vrot.lane.b32.xlu0 %v204, 32
    %v210 = vpop.permute.xlu0 %209
    %v213 = vadd.f32 %v193, %v208
    %v214 = vadd.f32 %v194, %v210
    %v215 = vtanh.pop %v213
    %v216 = vtanh.pop %v214
    %219 = vrot.lane.b32.xlu0 %v215, 64
    %v220 = vpop.permute.xlu0 %219
    %221 = vrot.lane.b32.xlu0 %v216, 64
    %v222 = vpop.permute.xlu0 %221
    %v225 = vmul.f32 %v175, %v220
    %v226 = vmul.f32 %v190, %v222
    %v229 = vrot.slane %v226, 7
    %vm230 = vcmask 1041409
    %v231 = vsel %vm230, %v229, %v225
    %232 = vrot.lane.b32.xlu0 %v231, 32
    %v233 = vpop.permute.xlu0 %232
    %vm235 = vcmask 254976
    %236 = vst.msk [vmem:[#allocation2] sm:$0x3] %vm235, %v233
    %v237 = vsel %vm90, %v233, 0
    %239 = vmatpush.msra.mxu0 0.0
    %240 = vmatpush.msra.mxu0 0.0
    %241 = vmatpush.msra.mxu0 0.0
    %242 = vmatpush.msra.mxu0 0.0
    %243 = vmatpush.msra.mxu0 0.0
    %244 = vmatpush.msra.mxu0 0.0
    %245 = vmatpush.msra.mxu0 0.0
    %246 = vmatpush.msra.mxu0 0.0
    %247 = vmatpush.msra.mxu0 0.0
    %248 = vmatpush.msra.mxu0 0.0
    %249 = vmatpush.msra.mxu0 0.0
    %250 = vmatpush.msra.mxu0 0.0
    %251 = vmatpush.msra.mxu0 %v123
    %252 = vmatpush.msra.mxu0 %v122
    %253 = vmatpush.msra.mxu0 %v121
    %254 = vmatpush.msra.mxu0 %v120
    %255 = vmatmul.f32.gmra.mxu0 %v237
    %v256 = vpop.f32.mrf.mxu0
    %v257 = vadd.f32 0.0, %v256
    %258 = vdwg.mxu0
    %v260 = vrot.slane %v257, 7
    %v263 = vadd.f32 %v115, %v260
    %v264 = vadd.f32 %v118, %v257
    %v265 = vxor.u32 %v263, 2147483648
    %v266 = vxor.u32 %v264, 2147483648
    %v267 = vmul.f32 %v265, 1.442695
    %v268 = vpow.pop %v267
    %v269 = vmul.f32 %v266, 1.442695
    %v270 = vpow.pop %v269
    %v271 = vadd.f32 %v268, 1.0
    %v272 = vadd.f32 %v270, 1.0
    %v273 = vrcp.pop %v271
    %v274 = vmul.f32 %v271, %v273
    %v275 = vsub.f32 1.0, %v274
    %v276 = vmul.f32 %v273, %v275
    %v277 = vadd.f32 %v273, %v276
    %vm278 = vweird.f32 %v271
    %vm279 = vweird.f32 %v273
    %vm280 = vmor %vm278, %vm279
    %v281 = vsel %vm280, %v273, %v277
    %v282 = vand.u32 2147483647, %v271
    %vm283 = vcmp.eq.f32.partialorder %v282, 8.507059e+37
    %v284 = vand.u32 %v271, 2147483648
    %v285 = vor.u32 1.1754944e-38, %v284
    %v286 = vsel %vm283, %v285, %v281
    %v287 = vmul.f32 1.0, %v286
    %v288 = vrcp.pop %v272
    %v289 = vmul.f32 %v272, %v288
    %v290 = vsub.f32 1.0, %v289
    %v291 = vmul.f32 %v288, %v290
    %v292 = vadd.f32 %v288, %v291
    %vm293 = vweird.f32 %v272
    %vm294 = vweird.f32 %v288
    %vm295 = vmor %vm293, %vm294
    %v296 = vsel %vm295, %v288, %v292
    %v297 = vand.u32 2147483647, %v272
    %vm298 = vcmp.eq.f32.partialorder %v297, 8.507059e+37
    %v299 = vand.u32 %v272, 2147483648
    %v300 = vor.u32 1.1754944e-38, %v299
    %v301 = vsel %vm298, %v300, %v296
    %v302 = vmul.f32 1.0, %v301
    %v303 = vtanh.pop %v263
    %v304 = vtanh.pop %v264
    %v307 = vrot.slane %v213, 7
    %v308 = vrot.slane %v214, 7
    %v311 = vmul.f32 %v287, %v307
    %v312 = vmul.f32 %v302, %v308
    %315 = vrot.lane.b32.xlu0 %v303, 64
    %v316 = vpop.permute.xlu0 %315
    %317 = vrot.lane.b32.xlu0 %v304, 64
    %v318 = vpop.permute.xlu0 %317
    %v321 = vmul.f32 %v287, %v316
    %v322 = vmul.f32 %v302, %v318
    %325 = vrot.lane.b32.xlu0 %v321, 32
    %v326 = vpop.permute.xlu0 %325
    %327 = vrot.lane.b32.xlu0 %v322, 32
    %v328 = vpop.permute.xlu0 %327
    %v331 = vadd.f32 %v311, %v326
    %v332 = vadd.f32 %v312, %v328
    %v333 = vtanh.pop %v331
    %v334 = vtanh.pop %v332
    %337 = vrot.lane.b32.xlu0 %v333, 64
    %v338 = vpop.permute.xlu0 %337
    %339 = vrot.lane.b32.xlu0 %v334, 64
    %v340 = vpop.permute.xlu0 %339
    %v343 = vmul.f32 %v287, %v338
    %v344 = vmul.f32 %v302, %v340
    %v347 = vrot.slane %v344, 7
    %vm348 = vcmask 1042434
    %v349 = vsel %vm348, %v347, %v343
    %350 = vrot.lane.b32.xlu0 %v349, 32
    %v351 = vpop.permute.xlu0 %350
    %s353 = scalar_lea.vmem [#allocation2], 2
    %vm354 = vcmask 256001
    %355 = vst.msk [vmem:[%s353 - $0x1] sm:$0x6] %vm354, %v351
    %v356 = vrot.slane %v343, 1
    %v357 = vsel %vm230, %v344, %v356
    %358 = vrot.lane.b32.xlu0 %v357, 32
    %v359 = vpop.permute.xlu0 %358
    %v360 = vsel %vm90, %v359, 0
    %362 = vmatpush.msra.mxu0 0.0
    %363 = vmatpush.msra.mxu0 0.0
    %364 = vmatpush.msra.mxu0 0.0
    %365 = vmatpush.msra.mxu0 0.0
    %366 = vmatpush.msra.mxu0 0.0
    %367 = vmatpush.msra.mxu0 0.0
    %368 = vmatpush.msra.mxu0 0.0
    %369 = vmatpush.msra.mxu0 0.0
    %370 = vmatpush.msra.mxu0 0.0
    %371 = vmatpush.msra.mxu0 0.0
    %372 = vmatpush.msra.mxu0 0.0
    %373 = vmatpush.msra.mxu0 0.0
    %374 = vmatpush.msra.mxu0 %v123
    %375 = vmatpush.msra.mxu0 %v122
    %376 = vmatpush.msra.mxu0 %v121
    %377 = vmatpush.msra.mxu0 %v120
    %378 = vmatmul.f32.gmra.mxu0 %v360
    %v379 = vpop.f32.mrf.mxu0
    %v380 = vadd.f32 0.0, %v379
    %381 = vdwg.mxu0
    %v383 = vrot.slane %v380, 6
    %v384 = vrot.slane %v380, 7
    %v387 = vadd.f32 %v115, %v383
    %v388 = vadd.f32 %v118, %v384
    %v389 = vxor.u32 %v387, 2147483648
    %v390 = vxor.u32 %v388, 2147483648
    %v391 = vmul.f32 %v389, 1.442695
    %v392 = vpow.pop %v391
    %v393 = vmul.f32 %v390, 1.442695
    %v394 = vpow.pop %v393
    %v395 = vadd.f32 %v392, 1.0
    %v396 = vadd.f32 %v394, 1.0
    %v397 = vrcp.pop %v395
    %v398 = vmul.f32 %v395, %v397
    %v399 = vsub.f32 1.0, %v398
    %v400 = vmul.f32 %v397, %v399
    %v401 = vadd.f32 %v397, %v400
    %vm402 = vweird.f32 %v395
    %vm403 = vweird.f32 %v397
    %vm404 = vmor %vm402, %vm403
    %v405 = vsel %vm404, %v397, %v401
    %v406 = vand.u32 2147483647, %v395
    %vm407 = vcmp.eq.f32.partialorder %v406, 8.507059e+37
    %v408 = vand.u32 %v395, 2147483648
    %v409 = vor.u32 1.1754944e-38, %v408
    %v410 = vsel %vm407, %v409, %v405
    %v411 = vmul.f32 1.0, %v410
    %v412 = vrcp.pop %v396
    %v413 = vmul.f32 %v396, %v412
    %v414 = vsub.f32 1.0, %v413
    %v415 = vmul.f32 %v412, %v414
    %v416 = vadd.f32 %v412, %v415
    %vm417 = vweird.f32 %v396
    %vm418 = vweird.f32 %v412
    %vm419 = vmor %vm417, %vm418
    %v420 = vsel %vm419, %v412, %v416
    %v421 = vand.u32 2147483647, %v396
    %vm422 = vcmp.eq.f32.partialorder %v421, 8.507059e+37
    %v423 = vand.u32 %v396, 2147483648
    %v424 = vor.u32 1.1754944e-38, %v423
    %v425 = vsel %vm422, %v424, %v420
    %v426 = vmul.f32 1.0, %v425
    %v427 = vtanh.pop %v387
    %v428 = vtanh.pop %v388
    %v431 = vrot.slane %v331, 7
    %v432 = vrot.slane %v332, 7
    %v435 = vmul.f32 %v411, %v431
    %v436 = vmul.f32 %v426, %v432
    %439 = vrot.lane.b32.xlu0 %v427, 64
    %v440 = vpop.permute.xlu0 %439
    %441 = vrot.lane.b32.xlu0 %v428, 64
    %v442 = vpop.permute.xlu0 %441
    %v445 = vmul.f32 %v411, %v440
    %v446 = vmul.f32 %v426, %v442
    %449 = vrot.lane.b32.xlu0 %v445, 32
    %v450 = vpop.permute.xlu0 %449
    %451 = vrot.lane.b32.xlu0 %v446, 32
    %v452 = vpop.permute.xlu0 %451
    %v455 = vadd.f32 %v435, %v450
    %v456 = vadd.f32 %v436, %v452
    %v457 = vtanh.pop %v455
    %v458 = vtanh.pop %v456
    %461 = vrot.lane.b32.xlu0 %v457, 64
    %v462 = vpop.permute.xlu0 %461
    %463 = vrot.lane.b32.xlu0 %v458, 64
    %v464 = vpop.permute.xlu0 %463
    %v467 = vmul.f32 %v411, %v462
    %v468 = vmul.f32 %v426, %v464
    %v471 = vrot.slane %v468, 7
    %vm472 = vcmask 1043459
    %v473 = vsel %vm472, %v471, %v467
    %474 = vrot.lane.b32.xlu0 %v473, 32
    %v475 = vpop.permute.xlu0 %474
    %s477 = scalar_lea.vmem [#allocation2], 4
    %vm478 = vcmask 257026
    %479 = vst.msk [vmem:[%s477 - $0x2] sm:$0xc] %vm478, %v475
    %v480 = vrot.slane %v467, 2
    %v481 = vrot.slane %v468, 1
    %v482 = vsel %vm230, %v481, %v480
    %483 = vrot.lane.b32.xlu0 %v482, 32
    %v484 = vpop.permute.xlu0 %483
    %v485 = vsel %vm90, %v484, 0
    %487 = vmatpush.msra.mxu0 0.0
    %488 = vmatpush.msra.mxu0 0.0
    %489 = vmatpush.msra.mxu0 0.0
    %490 = vmatpush.msra.mxu0 0.0
    %491 = vmatpush.msra.mxu0 0.0
    %492 = vmatpush.msra.mxu0 0.0
    %493 = vmatpush.msra.mxu0 0.0
    %494 = vmatpush.msra.mxu0 0.0
    %495 = vmatpush.msra.mxu0 0.0
    %496 = vmatpush.msra.mxu0 0.0
    %497 = vmatpush.msra.mxu0 0.0
    %498 = vmatpush.msra.mxu0 0.0
    %499 = vmatpush.msra.mxu0 %v123
    %500 = vmatpush.msra.mxu0 %v122
    %501 = vmatpush.msra.mxu0 %v121
    %502 = vmatpush.msra.mxu0 %v120
    %503 = vmatmul.f32.gmra.mxu0 %v485
    %v504 = vpop.f32.mrf.mxu0
    %v505 = vadd.f32 0.0, %v504
    %506 = vdwg.mxu0
    %v508 = vrot.slane %v505, 5
    %v509 = vrot.slane %v505, 6
    %v512 = vadd.f32 %v115, %v508
    %v513 = vadd.f32 %v118, %v509
    %v514 = vxor.u32 %v512, 2147483648
    %v515 = vxor.u32 %v513, 2147483648
    %v516 = vmul.f32 %v514, 1.442695
    %v517 = vpow.pop %v516
    %v518 = vmul.f32 %v515, 1.442695
    %v519 = vpow.pop %v518
    %v520 = vadd.f32 %v517, 1.0
    %v521 = vadd.f32 %v519, 1.0
    %v522 = vrcp.pop %v520
    %v523 = vmul.f32 %v520, %v522
    %v524 = vsub.f32 1.0, %v523
    %v525 = vmul.f32 %v522, %v524
    %v526 = vadd.f32 %v522, %v525
    %vm527 = vweird.f32 %v520
    %vm528 = vweird.f32 %v522
    %vm529 = vmor %vm527, %vm528
    %v530 = vsel %vm529, %v522, %v526
    %v531 = vand.u32 2147483647, %v520
    %vm532 = vcmp.eq.f32.partialorder %v531, 8.507059e+37
    %v533 = vand.u32 %v520, 2147483648
    %v534 = vor.u32 1.1754944e-38, %v533
    %v535 = vsel %vm532, %v534, %v530
    %v536 = vmul.f32 1.0, %v535
    %v537 = vrcp.pop %v521
    %v538 = vmul.f32 %v521, %v537
    %v539 = vsub.f32 1.0, %v538
    %v540 = vmul.f32 %v537, %v539
    %v541 = vadd.f32 %v537, %v540
    %vm542 = vweird.f32 %v521
    %vm543 = vweird.f32 %v537
    %vm544 = vmor %vm542, %vm543
    %v545 = vsel %vm544, %v537, %v541
    %v546 = vand.u32 2147483647, %v521
    %vm547 = vcmp.eq.f32.partialorder %v546, 8.507059e+37
    %v548 = vand.u32 %v521, 2147483648
    %v549 = vor.u32 1.1754944e-38, %v548
    %v550 = vsel %vm547, %v549, %v545
    %v551 = vmul.f32 1.0, %v550
    %v552 = vtanh.pop %v512
    %v553 = vtanh.pop %v513
    %v556 = vrot.slane %v455, 7
    %v557 = vrot.slane %v456, 7
    %v560 = vmul.f32 %v536, %v556
    %v561 = vmul.f32 %v551, %v557
    %564 = vrot.lane.b32.xlu0 %v552, 64
    %v565 = vpop.permute.xlu0 %564
    %566 = vrot.lane.b32.xlu0 %v553, 64
    %v567 = vpop.permute.xlu0 %566
    %v570 = vmul.f32 %v536, %v565
    %v571 = vmul.f32 %v551, %v567
    %574 = vrot.lane.b32.xlu0 %v570, 32
    %v575 = vpop.permute.xlu0 %574
    %576 = vrot.lane.b32.xlu0 %v571, 32
    %v577 = vpop.permute.xlu0 %576
    %v580 = vadd.f32 %v560, %v575
    %v581 = vadd.f32 %v561, %v577
    %v582 = vtanh.pop %v580
    %v583 = vtanh.pop %v581
    %586 = vrot.lane.b32.xlu0 %v582, 64
    %v587 = vpop.permute.xlu0 %586
    %588 = vrot.lane.b32.xlu0 %v583, 64
    %v589 = vpop.permute.xlu0 %588
    %v592 = vmul.f32 %v536, %v587
    %v593 = vmul.f32 %v551, %v589
    %v596 = vrot.slane %v593, 7
    %vm597 = vcmask 1044484
    %v598 = vsel %vm597, %v596, %v592
    %599 = vrot.lane.b32.xlu0 %v598, 32
    %v600 = vpop.permute.xlu0 %599
    %s602 = scalar_lea.vmem [#allocation2], 6
    %vm603 = vcmask 258051
    %604 = vst.msk [vmem:[%s602 - $0x3] sm:$0x18] %vm603, %v600
    %v605 = vrot.slane %v592, 3
    %v606 = vrot.slane %v593, 2
    %v607 = vsel %vm230, %v606, %v605
    %608 = vrot.lane.b32.xlu0 %v607, 32
    %v609 = vpop.permute.xlu0 %608
    %v610 = vsel %vm90, %v609, 0
    %612 = vmatpush.msra.mxu0 0.0
    %613 = vmatpush.msra.mxu0 0.0
    %614 = vmatpush.msra.mxu0 0.0
    %615 = vmatpush.msra.mxu0 0.0
    %616 = vmatpush.msra.mxu0 0.0
    %617 = vmatpush.msra.mxu0 0.0
    %618 = vmatpush.msra.mxu0 0.0
    %619 = vmatpush.msra.mxu0 0.0
    %620 = vmatpush.msra.mxu0 0.0
    %621 = vmatpush.msra.mxu0 0.0
    %622 = vmatpush.msra.mxu0 0.0
    %623 = vmatpush.msra.mxu0 0.0
    %624 = vmatpush.msra.mxu0 %v123
    %625 = vmatpush.msra.mxu0 %v122
    %626 = vmatpush.msra.mxu0 %v121
    %627 = vmatpush.msra.mxu0 %v120
    %628 = vmatmul.f32.gmra.mxu0 %v610
    %v629 = vpop.f32.mrf.mxu0
    %v630 = vadd.f32 0.0, %v629
    %631 = vdwg.mxu0
    %v633 = vrot.slane %v630, 4
    %v634 = vrot.slane %v630, 5
    %v637 = vadd.f32 %v115, %v633
    %v638 = vadd.f32 %v118, %v634
    %v639 = vxor.u32 %v637, 2147483648
    %v640 = vxor.u32 %v638, 2147483648
    %v641 = vmul.f32 %v639, 1.442695
    %v642 = vpow.pop %v641
    %v643 = vmul.f32 %v640, 1.442695
    %v644 = vpow.pop %v643
    %v645 = vadd.f32 %v642, 1.0
    %v646 = vadd.f32 %v644, 1.0
    %v647 = vrcp.pop %v645
    %v648 = vmul.f32 %v645, %v647
    %v649 = vsub.f32 1.0, %v648
    %v650 = vmul.f32 %v647, %v649
    %v651 = vadd.f32 %v647, %v650
    %vm652 = vweird.f32 %v645
    %vm653 = vweird.f32 %v647
    %vm654 = vmor %vm652, %vm653
    %v655 = vsel %vm654, %v647, %v651
    %v656 = vand.u32 2147483647, %v645
    %vm657 = vcmp.eq.f32.partialorder %v656, 8.507059e+37
    %v658 = vand.u32 %v645, 2147483648
    %v659 = vor.u32 1.1754944e-38, %v658
    %v660 = vsel %vm657, %v659, %v655
    %v661 = vmul.f32 1.0, %v660
    %v662 = vrcp.pop %v646
    %v663 = vmul.f32 %v646, %v662
    %v664 = vsub.f32 1.0, %v663
    %v665 = vmul.f32 %v662, %v664
    %v666 = vadd.f32 %v662, %v665
    %vm667 = vweird.f32 %v646
    %vm668 = vweird.f32 %v662
    %vm669 = vmor %vm667, %vm668
    %v670 = vsel %vm669, %v662, %v666
    %v671 = vand.u32 2147483647, %v646
    %vm672 = vcmp.eq.f32.partialorder %v671, 8.507059e+37
    %v673 = vand.u32 %v646, 2147483648
    %v674 = vor.u32 1.1754944e-38, %v673
    %v675 = vsel %vm672, %v674, %v670
    %v676 = vmul.f32 1.0, %v675
    %v677 = vtanh.pop %v637
    %v678 = vtanh.pop %v638
    %v681 = vrot.slane %v580, 7
    %v682 = vrot.slane %v581, 7
    %v685 = vmul.f32 %v661, %v681
    %v686 = vmul.f32 %v676, %v682
    %689 = vrot.lane.b32.xlu0 %v677, 64
    %v690 = vpop.permute.xlu0 %689
    %691 = vrot.lane.b32.xlu0 %v678, 64
    %v692 = vpop.permute.xlu0 %691
    %v695 = vmul.f32 %v661, %v690
    %v696 = vmul.f32 %v676, %v692
    %699 = vrot.lane.b32.xlu0 %v695, 32
    %v700 = vpop.permute.xlu0 %699
    %701 = vrot.lane.b32.xlu0 %v696, 32
    %v702 = vpop.permute.xlu0 %701
    %v705 = vadd.f32 %v685, %v700
    %v706 = vadd.f32 %v686, %v702
    %v707 = vtanh.pop %v705
    %v708 = vtanh.pop %v706
    %711 = vrot.lane.b32.xlu0 %v707, 64
    %v712 = vpop.permute.xlu0 %711
    %713 = vrot.lane.b32.xlu0 %v708, 64
    %v714 = vpop.permute.xlu0 %713
    %v717 = vmul.f32 %v661, %v712
    %v718 = vmul.f32 %v676, %v714
    %v721 = vrot.slane %v718, 7
    %vm722 = vcmask 1045509
    %v723 = vsel %vm722, %v721, %v717
    %724 = vrot.lane.b32.xlu0 %v723, 32
    %v725 = vpop.permute.xlu0 %724
    %s727 = scalar_lea.vmem [#allocation2], 8
    %vm728 = vcmask 259076
    %729 = vst.msk [vmem:[%s727 - $0x4] sm:$0x30] %vm728, %v725
    %v730 = vrot.slane %v717, 4
    %v731 = vrot.slane %v718, 3
    %v732 = vsel %vm230, %v731, %v730
    %733 = vrot.lane.b32.xlu0 %v732, 32
    %v734 = vpop.permute.xlu0 %733
    %v735 = vsel %vm90, %v734, 0
    %737 = vmatpush.msra.mxu0 0.0
    %738 = vmatpush.msra.mxu0 0.0
    %739 = vmatpush.msra.mxu0 0.0
    %740 = vmatpush.msra.mxu0 0.0
    %741 = vmatpush.msra.mxu0 0.0
    %742 = vmatpush.msra.mxu0 0.0
    %743 = vmatpush.msra.mxu0 0.0
    %744 = vmatpush.msra.mxu0 0.0
    %745 = vmatpush.msra.mxu0 0.0
    %746 = vmatpush.msra.mxu0 0.0
    %747 = vmatpush.msra.mxu0 0.0
    %748 = vmatpush.msra.mxu0 0.0
    %749 = vmatpush.msra.mxu0 %v123
    %750 = vmatpush.msra.mxu0 %v122
    %751 = vmatpush.msra.mxu0 %v121
    %752 = vmatpush.msra.mxu0 %v120
    %753 = vmatmul.f32.gmra.mxu0 %v735
    %v754 = vpop.f32.mrf.mxu0
    %v755 = vadd.f32 0.0, %v754
    %756 = vdwg.mxu0
    %v758 = vrot.slane %v755, 3
    %v759 = vrot.slane %v755, 4
    %v762 = vadd.f32 %v115, %v758
    %v763 = vadd.f32 %v118, %v759
    %v764 = vxor.u32 %v762, 2147483648
    %v765 = vxor.u32 %v763, 2147483648
    %v766 = vmul.f32 %v764, 1.442695
    %v767 = vpow.pop %v766
    %v768 = vmul.f32 %v765, 1.442695
    %v769 = vpow.pop %v768
    %v770 = vadd.f32 %v767, 1.0
    %v771 = vadd.f32 %v769, 1.0
    %v772 = vrcp.pop %v770
    %v773 = vmul.f32 %v770, %v772
    %v774 = vsub.f32 1.0, %v773
    %v775 = vmul.f32 %v772, %v774
    %v776 = vadd.f32 %v772, %v775
    %vm777 = vweird.f32 %v770
    %vm778 = vweird.f32 %v772
    %vm779 = vmor %vm777, %vm778
    %v780 = vsel %vm779, %v772, %v776
    %v781 = vand.u32 2147483647, %v770
    %vm782 = vcmp.eq.f32.partialorder %v781, 8.507059e+37
    %v783 = vand.u32 %v770, 2147483648
    %v784 = vor.u32 1.1754944e-38, %v783
    %v785 = vsel %vm782, %v784, %v780
    %v786 = vmul.f32 1.0, %v785
    %v787 = vrcp.pop %v771
    %v788 = vmul.f32 %v771, %v787
    %v789 = vsub.f32 1.0, %v788
    %v790 = vmul.f32 %v787, %v789
    %v791 = vadd.f32 %v787, %v790
    %vm792 = vweird.f32 %v771
    %vm793 = vweird.f32 %v787
    %vm794 = vmor %vm792, %vm793
    %v795 = vsel %vm794, %v787, %v791
    %v796 = vand.u32 2147483647, %v771
    %vm797 = vcmp.eq.f32.partialorder %v796, 8.507059e+37
    %v798 = vand.u32 %v771, 2147483648
    %v799 = vor.u32 1.1754944e-38, %v798
    %v800 = vsel %vm797, %v799, %v795
    %v801 = vmul.f32 1.0, %v800
    %v802 = vtanh.pop %v762
    %v803 = vtanh.pop %v763
    %v806 = vrot.slane %v705, 7
    %v807 = vrot.slane %v706, 7
    %v810 = vmul.f32 %v786, %v806
    %v811 = vmul.f32 %v801, %v807
    %814 = vrot.lane.b32.xlu0 %v802, 64
    %v815 = vpop.permute.xlu0 %814
    %816 = vrot.lane.b32.xlu0 %v803, 64
    %v817 = vpop.permute.xlu0 %816
    %v820 = vmul.f32 %v786, %v815
    %v821 = vmul.f32 %v801, %v817
    %824 = vrot.lane.b32.xlu0 %v820, 32
    %v825 = vpop.permute.xlu0 %824
    %826 = vrot.lane.b32.xlu0 %v821, 32
    %v827 = vpop.permute.xlu0 %826
    %v830 = vadd.f32 %v810, %v825
    %v831 = vadd.f32 %v811, %v827
    %v832 = vtanh.pop %v830
    %v833 = vtanh.pop %v831
    %836 = vrot.lane.b32.xlu0 %v832, 64
    %v837 = vpop.permute.xlu0 %836
    %838 = vrot.lane.b32.xlu0 %v833, 64
    %v839 = vpop.permute.xlu0 %838
    %v842 = vmul.f32 %v786, %v837
    %v843 = vmul.f32 %v801, %v839
    %v846 = vrot.slane %v843, 7
    %vm847 = vcmask 1046534
    %v848 = vsel %vm847, %v846, %v842
    %849 = vrot.lane.b32.xlu0 %v848, 32
    %v850 = vpop.permute.xlu0 %849
    %s852 = scalar_lea.vmem [#allocation2], 10
    %vm853 = vcmask 260101
    %854 = vst.msk [vmem:[%s852 - $0x5] sm:$0x60] %vm853, %v850
    %v855 = vrot.slane %v842, 5
    %v856 = vrot.slane %v843, 4
    %v857 = vsel %vm230, %v856, %v855
    %858 = vrot.lane.b32.xlu0 %v857, 32
    %v859 = vpop.permute.xlu0 %858
    %v860 = vsel %vm90, %v859, 0
    %862 = vmatpush.msra.mxu0 0.0
    %863 = vmatpush.msra.mxu0 0.0
    %864 = vmatpush.msra.mxu0 0.0
    %865 = vmatpush.msra.mxu0 0.0
    %866 = vmatpush.msra.mxu0 0.0
    %867 = vmatpush.msra.mxu0 0.0
    %868 = vmatpush.msra.mxu0 0.0
    %869 = vmatpush.msra.mxu0 0.0
    %870 = vmatpush.msra.mxu0 0.0
    %871 = vmatpush.msra.mxu0 0.0
    %872 = vmatpush.msra.mxu0 0.0
    %873 = vmatpush.msra.mxu0 0.0
    %874 = vmatpush.msra.mxu0 %v123
    %875 = vmatpush.msra.mxu0 %v122
    %876 = vmatpush.msra.mxu0 %v121
    %877 = vmatpush.msra.mxu0 %v120
    %878 = vmatmul.f32.gmra.mxu0 %v860
    %v879 = vpop.f32.mrf.mxu0
    %v880 = vadd.f32 0.0, %v879
    %881 = vdwg.mxu0
    %v883 = vrot.slane %v880, 2
    %v884 = vrot.slane %v880, 3
    %v887 = vadd.f32 %v115, %v883
    %v888 = vadd.f32 %v118, %v884
    %v889 = vxor.u32 %v887, 2147483648
    %v890 = vxor.u32 %v888, 2147483648
    %v891 = vmul.f32 %v889, 1.442695
    %v892 = vpow.pop %v891
    %v893 = vmul.f32 %v890, 1.442695
    %v894 = vpow.pop %v893
    %v895 = vadd.f32 %v892, 1.0
    %v896 = vadd.f32 %v894, 1.0
    %v897 = vrcp.pop %v895
    %v898 = vmul.f32 %v895, %v897
    %v899 = vsub.f32 1.0, %v898
    %v900 = vmul.f32 %v897, %v899
    %v901 = vadd.f32 %v897, %v900
    %vm902 = vweird.f32 %v895
    %vm903 = vweird.f32 %v897
    %vm904 = vmor %vm902, %vm903
    %v905 = vsel %vm904, %v897, %v901
    %v906 = vand.u32 2147483647, %v895
    %vm907 = vcmp.eq.f32.partialorder %v906, 8.507059e+37
    %v908 = vand.u32 %v895, 2147483648
    %v909 = vor.u32 1.1754944e-38, %v908
    %v910 = vsel %vm907, %v909, %v905
    %v911 = vmul.f32 1.0, %v910
    %v912 = vrcp.pop %v896
    %v913 = vmul.f32 %v896, %v912
    %v914 = vsub.f32 1.0, %v913
    %v915 = vmul.f32 %v912, %v914
    %v916 = vadd.f32 %v912, %v915
    %vm917 = vweird.f32 %v896
    %vm918 = vweird.f32 %v912
    %vm919 = vmor %vm917, %vm918
    %v920 = vsel %vm919, %v912, %v916
    %v921 = vand.u32 2147483647, %v896
    %vm922 = vcmp.eq.f32.partialorder %v921, 8.507059e+37
    %v923 = vand.u32 %v896, 2147483648
    %v924 = vor.u32 1.1754944e-38, %v923
    %v925 = vsel %vm922, %v924, %v920
    %v926 = vmul.f32 1.0, %v925
    %v927 = vtanh.pop %v887
    %v928 = vtanh.pop %v888
    %v931 = vrot.slane %v830, 7
    %v932 = vrot.slane %v831, 7
    %v935 = vmul.f32 %v911, %v931
    %v936 = vmul.f32 %v926, %v932
    %939 = vrot.lane.b32.xlu0 %v927, 64
    %v940 = vpop.permute.xlu0 %939
    %941 = vrot.lane.b32.xlu0 %v928, 64
    %v942 = vpop.permute.xlu0 %941
    %v945 = vmul.f32 %v911, %v940
    %v946 = vmul.f32 %v926, %v942
    %949 = vrot.lane.b32.xlu0 %v945, 32
    %v950 = vpop.permute.xlu0 %949
    %951 = vrot.lane.b32.xlu0 %v946, 32
    %v952 = vpop.permute.xlu0 %951
    %v955 = vadd.f32 %v935, %v950
    %v956 = vadd.f32 %v936, %v952
    %v957 = vtanh.pop %v955
    %v958 = vtanh.pop %v956
    %961 = vrot.lane.b32.xlu0 %v957, 64
    %v962 = vpop.permute.xlu0 %961
    %963 = vrot.lane.b32.xlu0 %v958, 64
    %v964 = vpop.permute.xlu0 %963
    %v967 = vmul.f32 %v911, %v962
    %v968 = vmul.f32 %v926, %v964
    %v971 = vrot.slane %v968, 7
    %vm972 = vcmask 1047559
    %v973 = vsel %vm972, %v971, %v967
    %974 = vrot.lane.b32.xlu0 %v973, 32
    %v975 = vpop.permute.xlu0 %974
    %s977 = scalar_lea.vmem [#allocation2], 12
    %vm978 = vcmask 261126
    %979 = vst.msk [vmem:[%s977 - $0x6] sm:$0xc0] %vm978, %v975
    %v980 = vrot.slane %v967, 6
    %v981 = vrot.slane %v968, 5
    %v982 = vsel %vm230, %v981, %v980
    %983 = vrot.lane.b32.xlu0 %v982, 32
    %v984 = vpop.permute.xlu0 %983
    %v985 = vsel %vm90, %v984, 0
    %987 = vmatpush.msra.mxu0 0.0
    %988 = vmatpush.msra.mxu0 0.0
    %989 = vmatpush.msra.mxu0 0.0
    %990 = vmatpush.msra.mxu0 0.0
    %991 = vmatpush.msra.mxu0 0.0
    %992 = vmatpush.msra.mxu0 0.0
    %993 = vmatpush.msra.mxu0 0.0
    %994 = vmatpush.msra.mxu0 0.0
    %995 = vmatpush.msra.mxu0 0.0
    %996 = vmatpush.msra.mxu0 0.0
    %997 = vmatpush.msra.mxu0 0.0
    %998 = vmatpush.msra.mxu0 0.0
    %999 = vmatpush.msra.mxu0 %v123
    %1000 = vmatpush.msra.mxu0 %v122
    %1001 = vmatpush.msra.mxu0 %v121
    %1002 = vmatpush.msra.mxu0 %v120
    %1003 = vmatmul.f32.gmra.mxu0 %v985
    %v1004 = vpop.f32.mrf.mxu0
    %v1005 = vadd.f32 0.0, %v1004
    %1006 = vdwg.mxu0
    %v1008 = vrot.slane %v1005, 1
    %v1009 = vrot.slane %v1005, 2
    %v1012 = vadd.f32 %v115, %v1008
    %v1013 = vadd.f32 %v118, %v1009
    %v1014 = vxor.u32 %v1012, 2147483648
    %v1015 = vxor.u32 %v1013, 2147483648
    %v1016 = vmul.f32 %v1014, 1.442695
    %v1017 = vpow.pop %v1016
    %v1018 = vmul.f32 %v1015, 1.442695
    %v1019 = vpow.pop %v1018
    %v1020 = vadd.f32 %v1017, 1.0
    %v1021 = vadd.f32 %v1019, 1.0
    %v1022 = vrcp.pop %v1020
    %v1023 = vmul.f32 %v1020, %v1022
    %v1024 = vsub.f32 1.0, %v1023
    %v1025 = vmul.f32 %v1022, %v1024
    %v1026 = vadd.f32 %v1022, %v1025
    %vm1027 = vweird.f32 %v1020
    %vm1028 = vweird.f32 %v1022
    %vm1029 = vmor %vm1027, %vm1028
    %v1030 = vsel %vm1029, %v1022, %v1026
    %v1031 = vand.u32 2147483647, %v1020
    %vm1032 = vcmp.eq.f32.partialorder %v1031, 8.507059e+37
    %v1033 = vand.u32 %v1020, 2147483648
    %v1034 = vor.u32 1.1754944e-38, %v1033
    %v1035 = vsel %vm1032, %v1034, %v1030
    %v1036 = vmul.f32 1.0, %v1035
    %v1037 = vrcp.pop %v1021
    %v1038 = vmul.f32 %v1021, %v1037
    %v1039 = vsub.f32 1.0, %v1038
    %v1040 = vmul.f32 %v1037, %v1039
    %v1041 = vadd.f32 %v1037, %v1040
    %vm1042 = vweird.f32 %v1021
    %vm1043 = vweird.f32 %v1037
    %vm1044 = vmor %vm1042, %vm1043
    %v1045 = vsel %vm1044, %v1037, %v1041
    %v1046 = vand.u32 2147483647, %v1021
    %vm1047 = vcmp.eq.f32.partialorder %v1046, 8.507059e+37
    %v1048 = vand.u32 %v1021, 2147483648
    %v1049 = vor.u32 1.1754944e-38, %v1048
    %v1050 = vsel %vm1047, %v1049, %v1045
    %v1051 = vmul.f32 1.0, %v1050
    %v1052 = vtanh.pop %v1012
    %v1053 = vtanh.pop %v1013
    %v1056 = vrot.slane %v955, 7
    %v1057 = vrot.slane %v956, 7
    %v1060 = vmul.f32 %v1036, %v1056
    %v1061 = vmul.f32 %v1051, %v1057
    %1064 = vrot.lane.b32.xlu0 %v1052, 64
    %v1065 = vpop.permute.xlu0 %1064
    %1066 = vrot.lane.b32.xlu0 %v1053, 64
    %v1067 = vpop.permute.xlu0 %1066
    %v1070 = vmul.f32 %v1036, %v1065
    %v1071 = vmul.f32 %v1051, %v1067
    %1074 = vrot.lane.b32.xlu0 %v1070, 32
    %v1075 = vpop.permute.xlu0 %1074
    %1076 = vrot.lane.b32.xlu0 %v1071, 32
    %v1077 = vpop.permute.xlu0 %1076
    %v1080 = vadd.f32 %v1060, %v1075
    %v1081 = vadd.f32 %v1061, %v1077
    %v1082 = vtanh.pop %v1080
    %v1083 = vtanh.pop %v1081
    %1086 = vrot.lane.b32.xlu0 %v1082, 64
    %v1087 = vpop.permute.xlu0 %1086
    %1088 = vrot.lane.b32.xlu0 %v1083, 64
    %v1089 = vpop.permute.xlu0 %1088
    %v1092 = vmul.f32 %v1036, %v1087
    %v1093 = vmul.f32 %v1051, %v1089
    %v1096 = vrot.slane %v1093, 7
    %1097 = vrot.lane.b32.xlu0 %v1092, 32
    %v1098 = vpop.permute.xlu0 %1097
    %1099 = vrot.lane.b32.xlu0 %v1096, 32
    %v1100 = vpop.permute.xlu0 %1099
    %s1103 = scalar_lea.vmem [#allocation2], 14
    %vm1104 = vcmask 261127
    %1105 = vst.msk [vmem:[%s1103 - $0x7] sm:$0x80] %vm1104, %v1098
    %vm1106 = vcmask 253952
    %1107 = vst.msk [vmem:[%s1103 + $0x1] sm:$0x1] %vm1106, %v1100
    %v1108 = vld [vmem:[#allocation2] sm:$0x3]
    %v1109 = vld [vmem:[#allocation2 + $0x2] sm:$0x3]
    %v1110 = vld [vmem:[#allocation2 + $0x4] sm:$0x3]
    %v1111 = vld [vmem:[#allocation2 + $0x6] sm:$0x3]
    %v1112 = vld [vmem:[#allocation2 + $0x8] sm:$0x3]
    %v1113 = vld [vmem:[#allocation2 + $0xa] sm:$0x3]
    %v1114 = vld [vmem:[#allocation2 + $0xc] sm:$0x3]
    %v1115 = vld [vmem:[#allocation2 + $0xe] sm:$0x3]
    %v1116 = vld [vmem:[#allocation8] sm:$0xff]
    %v1117 = vld [vmem:[#allocation8 + $0x8] sm:$0xff]
    %v1118 = vld [vmem:[#allocation8 + $0x10] sm:$0xff]
    %v1119 = vld [vmem:[#allocation8 + $0x18] sm:$0xff]
    %v1120 = vld [vmem:[%s5] sm:$0x1]
    %v1122 = vperm.slane %v1120, 0
    %1132 = vst [vmem:[#allocation1] ss:$4 sm:$0xff] %v1108
    %s1133 = scalar_lea.vmem [#allocation1], 1
    %1134 = vst [vmem:[%s1133] ss:$4 sm:$0xff] %v1109
    %s1135 = scalar_lea.vmem [#allocation1], 2
    %1136 = vst [vmem:[%s1135] ss:$4 sm:$0xff] %v1110
    %s1137 = scalar_lea.vmem [#allocation1], 3
    %1138 = vst [vmem:[%s1137] ss:$4 sm:$0xff] %v1111
    %s1139 = scalar_lea.vmem [#allocation1], 32
    %1140 = vst [vmem:[%s1139] ss:$4 sm:$0xff] %v1112
    %s1141 = scalar_lea.vmem [#allocation1], 33
    %1142 = vst [vmem:[%s1141] ss:$4 sm:$0xff] %v1113
    %s1143 = scalar_lea.vmem [#allocation1], 34
    %1144 = vst [vmem:[%s1143] ss:$4 sm:$0xff] %v1114
    %s1145 = scalar_lea.vmem [#allocation1], 35
    %1146 = vst [vmem:[%s1145] ss:$4 sm:$0xff] %v1115
    %v1147 = vld.sshfl [vmem:[#allocation1] sm:$0xff pattern:$0x73625140]
    %v1148 = vld.sshfl [vmem:[#allocation1 + $0x20] sm:$0xff pattern:$0x73625140]
    %v1149 = vsel %vm90, %v1147, 0
    %v1151 = vsel %vm90, %v1148, 0
    %1153 = vmatpush.msra.mxu0 0.0
    %1154 = vmatpush.msra.mxu0 0.0
    %1155 = vmatpush.msra.mxu0 0.0
    %1156 = vmatpush.msra.mxu0 0.0
    %1157 = vmatpush.msra.mxu0 0.0
    %1158 = vmatpush.msra.mxu0 0.0
    %1159 = vmatpush.msra.mxu0 0.0
    %1160 = vmatpush.msra.mxu0 0.0
    %1161 = vmatpush.msra.mxu0 0.0
    %1162 = vmatpush.msra.mxu0 0.0
    %1163 = vmatpush.msra.mxu0 0.0
    %1164 = vmatpush.msra.mxu0 0.0
    %1165 = vmatpush.msra.mxu0 %v1119
    %1166 = vmatpush.msra.mxu0 %v1118
    %1167 = vmatpush.msra.mxu0 %v1117
    %1168 = vmatpush.msra.mxu0 %v1116
    %1169 = vmatmul.f32.gmra.mxu0 %v1149
    %v1170 = vpop.f32.mrf.mxu0
    %v1171 = vadd.f32 %v1122, %v1170
    %1172 = vmatmul.f32.gmra.mxu0 %v1151
    %v1173 = vpop.f32.mrf.mxu0
    %v1174 = vadd.f32 %v1122, %v1173
    %1175 = vdwg.mxu0
    %v1176 = vtanh.pop %v1171
    %v1177 = vtanh.pop %v1174
    %v1180 = vrot.slane %v1176, 2
    %v1181 = vrot.slane %v1176, 4
    %v1182 = vrot.slane %v1176, 6
    %v1183 = vrot.slane %v1177, 2
    %v1184 = vrot.slane %v1177, 4
    %v1185 = vrot.slane %v1177, 6
    %v1192 = vld [vmem:[%s6] sm:$0x1]
    %v1194 = vperm.slane %v1192, 0
    %v1196 = vmul.f32 %v1176, %v1194
    %v1197 = vmul.f32 %v1180, %v1194
    %v1198 = vmul.f32 %v1181, %v1194
    %v1199 = vmul.f32 %v1182, %v1194
    %v1200 = vmul.f32 %v1177, %v1194
    %v1201 = vmul.f32 %v1183, %v1194
    %v1202 = vmul.f32 %v1184, %v1194
    %v1203 = vmul.f32 %v1185, %v1194
    %v1204 = vsel %vm235, %v1196, 0.0
    %1205 = vadd.xlane.f32.xlu0 %v1204
    %v1206 = vpop.xlane.xlu0 %1205
    %v1207 = vsel %vm235, %v1197, 0.0
    %1208 = vadd.xlane.f32.xlu0 %v1207
    %v1209 = vpop.xlane.xlu0 %1208
    %v1210 = vsel %vm235, %v1198, 0.0
    %1211 = vadd.xlane.f32.xlu0 %v1210
    %v1212 = vpop.xlane.xlu0 %1211
    %v1213 = vsel %vm235, %v1199, 0.0
    %1214 = vadd.xlane.f32.xlu0 %v1213
    %v1215 = vpop.xlane.xlu0 %1214
    %v1216 = vsel %vm235, %v1200, 0.0
    %1217 = vadd.xlane.f32.xlu0 %v1216
    %v1218 = vpop.xlane.xlu0 %1217
    %v1219 = vsel %vm235, %v1201, 0.0
    %1220 = vadd.xlane.f32.xlu0 %v1219
    %v1221 = vpop.xlane.xlu0 %1220
    %v1222 = vsel %vm235, %v1202, 0.0
    %1223 = vadd.xlane.f32.xlu0 %v1222
    %v1224 = vpop.xlane.xlu0 %1223
    %v1225 = vsel %vm235, %v1203, 0.0
    %1226 = vadd.xlane.f32.xlu0 %v1225
    %v1227 = vpop.xlane.xlu0 %1226
    %vm1228 = vcmask 1041408
    %v1229 = vsel %vm1228, %v1206, -inf
    %v1230 = vsel %vm1228, %v1209, -inf
    %v1231 = vsel %vm1228, %v1212, -inf
    %v1232 = vsel %vm1228, %v1215, -inf
    %v1233 = vsel %vm1228, %v1218, -inf
    %v1234 = vmax.f32 %v1229, %v1233
    %v1235 = vsel %vm1228, %v1221, -inf
    %v1236 = vmax.f32 %v1230, %v1235
    %v1237 = vsel %vm1228, %v1224, -inf
    %v1238 = vmax.f32 %v1231, %v1237
    %v1239 = vsel %vm1228, %v1227, -inf
    %v1240 = vmax.f32 %v1232, %v1239
    %v1241 = vmax.f32 %v1234, %v1236
    %v1242 = vmax.f32 %v1238, %v1240
    %v1243 = vmax.f32 %v1241, %v1242
    %v1244 = vsub.f32 %v1206, %v1243
    %v1245 = vsub.f32 %v1209, %v1243
    %v1246 = vsub.f32 %v1212, %v1243
    %v1247 = vsub.f32 %v1215, %v1243
    %v1248 = vsub.f32 %v1218, %v1243
    %v1249 = vsub.f32 %v1221, %v1243
    %v1250 = vsub.f32 %v1224, %v1243
    %v1251 = vsub.f32 %v1227, %v1243
    %v1252 = vmul.f32 %v1244, 1.442695
    %v1253 = vpow.pop %v1252
    %v1254 = vmul.f32 %v1245, 1.442695
    %v1255 = vpow.pop %v1254
    %v1256 = vmul.f32 %v1246, 1.442695
    %v1257 = vpow.pop %v1256
    %v1258 = vmul.f32 %v1247, 1.442695
    %v1259 = vpow.pop %v1258
    %v1260 = vmul.f32 %v1248, 1.442695
    %v1261 = vpow.pop %v1260
    %v1262 = vmul.f32 %v1249, 1.442695
    %v1263 = vpow.pop %v1262
    %v1264 = vmul.f32 %v1250, 1.442695
    %v1265 = vpow.pop %v1264
    %v1266 = vmul.f32 %v1251, 1.442695
    %v1267 = vpow.pop %v1266
    %v1268 = vsel %vm1228, %v1253, 0.0
    %v1269 = vsel %vm1228, %v1255, 0.0
    %v1270 = vadd.f32 %v1268, %v1269
    %v1271 = vsel %vm1228, %v1257, 0.0
    %v1272 = vadd.f32 %v1270, %v1271
    %v1273 = vsel %vm1228, %v1259, 0.0
    %v1274 = vadd.f32 %v1272, %v1273
    %v1275 = vsel %vm1228, %v1261, 0.0
    %v1276 = vadd.f32 %v1274, %v1275
    %v1277 = vsel %vm1228, %v1263, 0.0
    %v1278 = vadd.f32 %v1276, %v1277
    %v1279 = vsel %vm1228, %v1265, 0.0
    %v1280 = vadd.f32 %v1278, %v1279
    %v1281 = vsel %vm1228, %v1267, 0.0
    %v1282 = vadd.f32 %v1280, %v1281
    %v1283 = vrcp.pop %v1282
    %v1284 = vmul.f32 %v1253, %v1283
    %v1285 = vmul.f32 %v1255, %v1283
    %v1286 = vmul.f32 %v1257, %v1283
    %v1287 = vmul.f32 %v1259, %v1283
    %v1288 = vmul.f32 %v1261, %v1283
    %v1289 = vmul.f32 %v1263, %v1283
    %v1290 = vmul.f32 %v1265, %v1283
    %v1291 = vmul.f32 %v1267, %v1283
    %v1292 = vmul.f32 %v1108, %v1284
    %v1293 = vmul.f32 %v1109, %v1285
    %v1294 = vmul.f32 %v1110, %v1286
    %v1295 = vmul.f32 %v1111, %v1287
    %v1296 = vmul.f32 %v1112, %v1288
    %v1297 = vmul.f32 %v1113, %v1289
    %v1298 = vmul.f32 %v1114, %v1290
    %v1299 = vmul.f32 %v1115, %v1291
    %v1300 = vsel %vm235, %v1292, 0.0
    %v1301 = vsel %vm235, %v1293, 0.0
    %v1302 = vadd.f32 %v1300, %v1301
    %v1303 = vsel %vm235, %v1294, 0.0
    %v1304 = vadd.f32 %v1302, %v1303
    %v1305 = vsel %vm235, %v1295, 0.0
    %v1306 = vadd.f32 %v1304, %v1305
    %v1307 = vsel %vm235, %v1296, 0.0
    %v1308 = vadd.f32 %v1306, %v1307
    %v1309 = vsel %vm235, %v1297, 0.0
    %v1310 = vadd.f32 %v1308, %v1309
    %v1311 = vsel %vm235, %v1298, 0.0
    %v1312 = vadd.f32 %v1310, %v1311
    %v1313 = vsel %vm235, %v1299, 0.0
    %v1314 = vadd.f32 %v1312, %v1313
    %v1315 = vld [vmem:[%s7] sm:$0xff]
    %v1316 = vld [vmem:[%s7 + $0x8] sm:$0xff]
    %v1317 = vld [vmem:[%s7 + $0x10] sm:$0xff]
    %v1318 = vld [vmem:[%s7 + $0x18] sm:$0xff]
    %v1319 = vld [vmem:[%s8] sm:$0x1]
    %v1321 = vperm.slane %v1319, 0
    %v1324 = vsel %vm90, %v1314, 0
    %1326 = vmatpush.msra.mxu0 0.0
    %1327 = vmatpush.msra.mxu0 0.0
    %1328 = vmatpush.msra.mxu0 0.0
    %1329 = vmatpush.msra.mxu0 0.0
    %1330 = vmatpush.msra.mxu0 0.0
    %1331 = vmatpush.msra.mxu0 0.0
    %1332 = vmatpush.msra.mxu0 0.0
    %1333 = vmatpush.msra.mxu0 0.0
    %1334 = vmatpush.msra.mxu0 0.0
    %1335 = vmatpush.msra.mxu0 0.0
    %1336 = vmatpush.msra.mxu0 0.0
    %1337 = vmatpush.msra.mxu0 0.0
    %1338 = vmatpush.msra.mxu0 %v1318
    %1339 = vmatpush.msra.mxu0 %v1317
    %1340 = vmatpush.msra.mxu0 %v1316
    %1341 = vmatpush.msra.mxu0 %v1315
    %1342 = vmatmul.f32.gmra.mxu0 %v1324
    %v1343 = vpop.f32.mrf.mxu0
    %v1344 = vadd.f32 %v1321, %v1343
    %1345 = vdwg.mxu0
    %vm1346 = vcmask 25600
    %v1347 = vsel %vm1346, %v1344, -inf
    %1348 = vmax.xlane.f32.xlu0 %v1347
    %v1349 = vpop.xlane.xlu0 %1348
    %v1350 = vsub.f32 %v1344, %v1349
    %v1351 = vmul.f32 %v1350, 1.442695
    %v1352 = vpow.pop %v1351
    %v1353 = vsel %vm1346, %v1352, 0.0
    %1354 = vadd.xlane.f32.xlu0 %v1353
    %v1355 = vpop.xlane.xlu0 %1354
    %v1356 = vrcp.pop %v1355
    %v1357 = vmul.f32 %v1355, %v1356
    %v1358 = vsub.f32 1.0, %v1357
    %v1359 = vmul.f32 %v1356, %v1358
    %v1360 = vadd.f32 %v1356, %v1359
    %vm1361 = vweird.f32 %v1355
    %vm1362 = vweird.f32 %v1356
    %vm1363 = vmor %vm1361, %vm1362
    %v1364 = vsel %vm1363, %v1356, %v1360
    %v1365 = vand.u32 2147483647, %v1355
    %vm1366 = vcmp.eq.f32.partialorder %v1365, 8.507059e+37
    %v1367 = vand.u32 %v1355, 2147483648
    %v1368 = vor.u32 1.1754944e-38, %v1367
    %v1369 = vsel %vm1366, %v1368, %v1364
    %v1370 = vmul.f32 %v1352, %v1369
    %1371 = vst.msk [vmem:[#allocation9] sm:$0x3] %vm1346, %v1370
    // Predicated region
    $region50: #{tpu_custom_call.1} parent=1 // pred_check
      _
    $region51: #{tpu_custom_call.1} parent=1 // pred_check_branch
      %1373 = sbr.rel (0) target = $region53
    $region52: #{tpu_custom_call.1} parent=1 // pred_region
      %1375 = vsyncadd [#allocation5], 0
      %s1377 = sshll.u32 [#allocation9], 4
      %s1378 = int_to_ptr.vmem [resolvable:$true] %s1377
      %s1379 = sshll.u32 %s9, 4
      %s1380 = int_to_ptr.hbm [resolvable:$true] %s1379
      %1382 = dma.vmem_to_hbm [thread:$0]  %s1378, 32, %s1380, [#allocation5]
    $region53: #{tpu_custom_call.1} parent=1 // pred_fallthru
      _
    // Predicated region
    $region54: #{tpu_custom_call.1} parent=1 // pred_check
      _
    $region55: #{tpu_custom_call.1} parent=1 // pred_check_branch
      %1384 = sbr.rel (0) target = $region57
    $region56: #{tpu_custom_call.1} parent=1 // pred_region
      %1386 = dma.done [#allocation5], 32
    $region57: #{tpu_custom_call.1} parent=1 // pred_fallthru
      _
    %1387 = vsyncpa [#allocation4], 1
    %1388 = vsyncpa [#allocation7], 1
    %1389 = vsyncpa [#allocation5], 1

</llo_original>
